<compile_context>
chip_gen: v5e
topology: v5e:2x2
jax: 0.10.0
libtpu: 0.0.40
codegen_flags: <defaults>
</compile_context>

<pallas_src>
import functools

import jax
import jax.numpy as jnp
from jax import lax
from jax.experimental import pallas as pl
from jax.experimental.pallas import tpu as pltpu


def _switch_gate_kernel(x_ref, w_ref, b_ref, out_ref, *, num_experts: int,
                        mxu_w_stationary: bool):
    """One token tile.

    x_ref:   (TILE_N, D)  input dtype (f32 or bf16)
    w_ref:   (E, D)       gate weight, nn.Linear layout, input dtype
    b_ref:   (E, 1)       gate bias, f32
    out_ref: (E, TILE_N)  f32 unnormalized top-1-masked gate scores
    """
    if mxu_w_stationary:
        # (TILE_N, E) = x @ w^T : the resident gate weight is the MXU
        # stationary (pushed) operand, so weight pushes happen only D/256
        # times per tile and are amortized over all TILE_N streamed rows.
        # The small (TILE_N, E) result is transposed on the XLU (free slot)
        # so everything downstream runs lane-dense in (E, TILE_N).
        logits = jnp.transpose(
            lax.dot_general(
                x_ref[...], w_ref[...],
                dimension_numbers=(((1,), (1,)), ((), ())),
                preferred_element_type=jnp.float32))              # (E, TILE_N)
    else:
        # Fallback orientation (q.k^T pattern): directly (E, TILE_N).
        logits = lax.dot_general(
            w_ref[...], x_ref[...],
            dimension_numbers=(((1,), (1,)), ((), ())),
            preferred_element_type=jnp.float32)                   # (E, TILE_N)

    logits = logits + b_ref[...]                                  # (E, TILE_N)

    # Top-1 mask straight from the logits (softmax is monotonic, so this is
    # the same expert as topk(1) on the softmax), with a lowest-index
    # tie-break.  Keeping this off the exp/reciprocal chain lets the VPU
    # compare/select overlap with EUP latency and avoids exp-rounding ties.
    m = jnp.max(logits, axis=0, keepdims=True)                    # (1, TILE_N)
    eidx = lax.broadcasted_iota(jnp.int32, logits.shape, 0)       # (E, TILE_N)
    first_idx = jnp.min(jnp.where(logits == m, eidx, num_experts),
                        axis=0, keepdims=True)                    # (1, TILE_N)
    mask = eidx == first_idx                                      # (E, TILE_N)

    # Numerically stable softmax over experts (sublane axis 0), all f32.
    e = jnp.exp(logits - m)                                       # EUP
    s = jnp.sum(e, axis=0, keepdims=True)                         # (1, TILE_N)
    r = pl.reciprocal(s, approx=True)                             # EUP, no VALU div
    r = r * (2.0 - s * r)                                         # one NR step
    gate = e * r                                                  # (E, TILE_N)

    # Unnormalized masked scores; lane-dense, unmasked store.
    out_ref[...] = jnp.where(mask, gate, 0.0).astype(out_ref.dtype)


def _vmem_capacity_bytes() -> int:
    """Physical per-core VMEM (128 MiB on v5e/v6e, 64 MiB on v7x)."""
    try:
        return int(pltpu.get_tpu_info().vmem_capacity_bytes)
    except Exception:
        return 64 << 20   # conservative fallback (v7x per-TensorCore VMEM)


def _choose_tile_n(n_tokens: int, dim: int, x_itemsize: int,
                   vmem_cap: int, requested):
    # ~55% of physical VMEM for the double-buffered x stream; the rest covers
    # the resident weight/bias, the (E, tile) output buffers and scratch.
    cap = max(128, ((int(0.55 * vmem_cap) // (2 * dim * x_itemsize)) // 128) * 128)
    tile = 2048 if requested is None else int(requested)
    tile = min(tile, cap)
    # Guarantee >= 2 grid blocks for medium/large N so both v7x TensorCores
    # get work under dimension_semantics=("parallel",).  No effect on v5e/v6e.
    if n_tokens >= 256:
        tile = min(tile, max(128, ((n_tokens // 2) // 128) * 128))
    tile = max(128, (tile // 128) * 128)
    if tile >= n_tokens:
        tile = n_tokens           # tiny inputs: single full block
    return tile


def _build_gate_call(*, n_tokens, dim, num_experts, tile_n, vmem_limit,
                     x_itemsize, w_itemsize, resident_single_buffer,
                     mxu_w_stationary):
    grid = (pl.cdiv(n_tokens, tile_n),)
    resident_kwargs = {}
    if resident_single_buffer:
        # Weight / bias never change across grid steps; the default second
        # pipeline buffer for them is dead VMEM.
        resident_kwargs = dict(pipeline_mode=pl.Buffered(1))

    kernel = functools.partial(_switch_gate_kernel, num_experts=num_experts,
                               mxu_w_stationary=mxu_w_stationary)
    return pl.pallas_call(
        kernel,
        out_shape=jax.ShapeDtypeStruct((num_experts, n_tokens), jnp.float32),
        grid=grid,
        in_specs=[
            pl.BlockSpec((tile_n, dim), lambda i: (i, 0)),                  # x tile
            pl.BlockSpec((num_experts, dim), lambda i: (0, 0),
                         **resident_kwargs),                                # weight
            pl.BlockSpec((num_experts, 1), lambda i: (0, 0),
                         **resident_kwargs),                                # bias
        ],
        out_specs=pl.BlockSpec((num_experts, tile_n), lambda i: (0, i)),
        compiler_params=pltpu.CompilerParams(
            dimension_semantics=("parallel",),     # megacore-shardable on v7x
            vmem_limit_bytes=vmem_limit,
        ),
        cost_estimate=pl.CostEstimate(
            flops=2 * n_tokens * dim * num_experts,
            transcendentals=n_tokens * num_experts,
            bytes_accessed=(n_tokens * dim * x_itemsize
                            + num_experts * dim * w_itemsize
                            + num_experts * 4
                            + num_experts * n_tokens * 4),
        ),
    )


def switch_gate(x, w_gate, b_gate, *, capacity_factor: float = 1.0,
                epsilon: float = 1e-6, tile_n=None, use_aux_loss: bool = False):
    """SwitchGate forward.

    x:      (N, dim)           f32 or bf16 tokens
    w_gate: (num_experts, dim) nn.Linear weight layout
    b_gate: (num_experts,)     bias
    Returns (gate_scores (N, num_experts) f32, aux_loss or None).
    """
    n_tokens, dim = x.shape
    num_experts, dim_w = w_gate.shape
    assert dim_w == dim, "w_gate must be (num_experts, dim)"
    capacity = float(int(capacity_factor * n_tokens))   # int(...) as in PyTorch

    x_itemsize = jnp.dtype(x.dtype).itemsize
    w_itemsize = jnp.dtype(w_gate.dtype).itemsize
    vmem_cap = _vmem_capacity_bytes()
    tile = _choose_tile_n(n_tokens, dim, x_itemsize, vmem_cap, tile_n)

    # TODO(synk): for very large reduction dims (f32 dim >= ~16K on v7x) add a
    # K grid axis over `dim` with an (E, tile_n) f32 accumulator scratch
    # (pl.when init/finalize, K axis "arbitrary") instead of shrinking tile_n.
    est_vmem = (2 * tile * dim * x_itemsize            # double-buffered x tiles
                + num_experts * dim * w_itemsize       # resident weight
                + 2 * num_experts * tile * 4           # out tiles
                + num_experts * 4                      # bias
                + (4 << 20))                           # compiler slack
    vmem_limit = int(min(max(2 * est_vmem, 16 << 20), int(0.85 * vmem_cap)))

    b2 = b_gate.astype(jnp.float32).reshape(num_experts, 1)

    common = dict(n_tokens=n_tokens, dim=dim, num_experts=num_experts,
                  tile_n=tile, vmem_limit=vmem_limit,
                  x_itemsize=x_itemsize, w_itemsize=w_itemsize)
    # Preferred config first; fall back to progressively more conservative
    # lowerings if this jax/Mosaic version rejects an option (e.g.
    # pipeline_mode=Buffered(1) or the in-kernel (TILE_N,E)->(E,TILE_N)
    # transpose).  The last config is the previously-reviewed known design.
    attempts = (
        dict(resident_single_buffer=True,  mxu_w_stationary=True),
        dict(resident_single_buffer=False, mxu_w_stationary=True),
        dict(resident_single_buffer=False, mxu_w_stationary=False),
    )
    masked_t, last_err = None, None
    for cfg in attempts:
        try:
            masked_t = jax.block_until_ready(
                _build_gate_call(**common, **cfg)(x, w_gate, b2))
            break
        except Exception as err:          # lowering rejection -> next config
            last_err = err
    if masked_t is None:
        raise last_err

    # Global per-expert normalization + capacity scaling: the denominator is a
    # sum over ALL tokens, so it is done as a trivial O(N*E) jnp epilogue
    # instead of a sequential in-kernel accumulator (which would break the
    # "parallel" token axis).
    # TODO(synk): for small dim (<~512) fold this epilogue (and the
    # (E,N)->(N,E) transpose) into the downstream dispatch consumer, or keep
    # the (E,N) layout downstream, to save ~3 HBM passes over the gate tensor.
    denom = jnp.sum(masked_t, axis=1, keepdims=True) + epsilon     # (E, 1)
    gate_scores = (masked_t / denom * capacity).T                  # (N, E), f32

    if use_aux_loss:
        # Mirrors the PyTorch code verbatim (it only broadcasts when N == E,
        # exactly like the original module).
        load = gate_scores.sum(0)
        importance = gate_scores.sum(1)
        loss = jnp.mean((load - importance) ** 2)
        return gate_scores, loss
    return gate_scores, None


def _reference_switch_gate(x, w_gate, b_gate, *, capacity_factor=1.0,
                           epsilon=1e-6):
    """Pure-JAX reference mirroring the PyTorch forward (f32 math)."""
    logits = jnp.dot(x.astype(jnp.float32), w_gate.astype(jnp.float32).T,
                     precision=lax.Precision.HIGHEST) + b_gate[None, :]
    gs = jax.nn.softmax(logits, axis=-1)
    capacity = int(capacity_factor * x.shape[0])
    idx = jnp.argmax(gs, axis=-1)
    mask = jax.nn.one_hot(idx, gs.shape[-1], dtype=gs.dtype)
    masked = gs * mask
    denom = masked.sum(0, keepdims=True) + epsilon
    return masked / denom * capacity


if __name__ == "__main__":
    key = jax.random.PRNGKey(0)
    k_x, k_w, k_b = jax.random.split(key, 3)

    n_tokens, dim, num_experts = 256, 128, 8

    bound = 1.0 / (dim ** 0.5)
    x = jax.random.normal(k_x, (n_tokens, dim), dtype=jnp.float32)
    # nn.Linear(dim, num_experts) parameter shapes: weight (E, dim), bias (E,)
    w_gate = jax.random.uniform(k_w, (num_experts, dim), dtype=jnp.float32,
                                minval=-bound, maxval=bound)
    b_gate = jax.random.uniform(k_b, (num_experts,), dtype=jnp.float32,
                                minval=-bound, maxval=bound)

    # ---- f32 path (auto tile -> 128-token tiles, 2 parallel grid blocks) ---
    gate_scores, aux = switch_gate(x, w_gate, b_gate,
                                   capacity_factor=1.0, epsilon=1e-6)
    gate_scores = jax.block_until_ready(gate_scores)
    ref = _reference_switch_gate(x, w_gate, b_gate)
    assert gate_scores.shape == (n_tokens, num_experts)
    assert aux is None
    assert bool(jnp.all(jnp.isfinite(gate_scores)))
    assert jnp.allclose(gate_scores, ref, atol=1e-3, rtol=1e-3), (
        "f32 mismatch, max abs err = %g"
        % float(jnp.max(jnp.abs(gate_scores - ref))))

    # ---- bf16 activation/weight path (halves the dominant x HBM stream) ----
    x_bf = x.astype(jnp.bfloat16)
    w_bf = w_gate.astype(jnp.bfloat16)
    gate_bf, _ = switch_gate(x_bf, w_bf, b_gate,
                             capacity_factor=1.0, epsilon=1e-6)
    gate_bf = jax.block_until_ready(gate_bf)
    ref_bf = _reference_switch_gate(x_bf.astype(jnp.float32),
                                    w_bf.astype(jnp.float32), b_gate)
    assert gate_bf.dtype == jnp.float32  # gate output stays f32
    assert jnp.allclose(gate_bf, ref_bf, atol=5e-3, rtol=5e-3), (
        "bf16 mismatch, max abs err = %g"
        % float(jnp.max(jnp.abs(gate_bf - ref_bf))))

    print("KERNEL_OK")
</pallas_src>

<mosaic_0001>
module attributes {stable_mosaic.version = 11 : i64} {
  func.func @_switch_gate_kernel(%arg0: i32, %arg1: memref<128x128xf32, #tpu.memory_space<vmem>>, %arg2: memref<8x128xf32, #tpu.memory_space<vmem>>, %arg3: memref<8x1xf32, #tpu.memory_space<vmem>>, %arg4: memref<8x128xf32, #tpu.memory_space<vmem>>) attributes {dimension_semantics = [#tpu.dimension_semantics<parallel>], iteration_bounds = array<i64: 2>, scalar_prefetch = 0 : i64, scratch_operands = 0 : i64, tpu.core_type = #tpu.core_type<tc>, window_params = [{transform_indices = @transform_0, window_bounds = array<i64: 128, 128>}, {pipeline_mode = #tpu.pipeline_mode<synchronous>, transform_indices = @transform_1, window_bounds = array<i64: 8, 128>}, {pipeline_mode = #tpu.pipeline_mode<synchronous>, transform_indices = @transform_2, window_bounds = array<i64: 8, 1>}, {transform_indices = @transform_3, window_bounds = array<i64: 8, 128>}]} {
    %c0 = arith.constant 0 : index
    %c0_0 = arith.constant 0 : index
    %0 = vector.load %arg1[%c0, %c0_0] : memref<128x128xf32, #tpu.memory_space<vmem>>, vector<128x128xf32>
    %c0_1 = arith.constant 0 : index
    %c0_2 = arith.constant 0 : index
    %1 = vector.load %arg2[%c0_1, %c0_2] : memref<8x128xf32, #tpu.memory_space<vmem>>, vector<8x128xf32>
    %cst = arith.constant dense<0.000000e+00> : vector<128x8xf32>
    %2 = tpu.matmul %0, %1, %cst {dimension_numbers = #tpu.dot_dimension_numbers<[1], [1], [0], [0], [0, 0, 1, 0], [], []>} : vector<128x128xf32>, vector<8x128xf32>, vector<128x8xf32> -> vector<128x8xf32>
    %3 = tpu.transpose %2, [1, 0] : vector<128x8xf32> -> vector<8x128xf32>
    %c0_3 = arith.constant 0 : index
    %c0_4 = arith.constant 0 : index
    %4 = vector.load %arg3[%c0_3, %c0_4] : memref<8x1xf32, #tpu.memory_space<vmem>>, vector<8x1xf32>
    %5 = vector.broadcast %4 : vector<8x1xf32> to vector<8x128xf32>
    %6 = arith.addf %3, %5 : vector<8x128xf32>
    %cst_5 = arith.constant dense<0xFF800000> : vector<128xf32>
    %7 = vector.multi_reduction <maximumf>, %6, %cst_5 [0] : vector<8x128xf32> to vector<128xf32>
    %8 = vector.shape_cast %7 : vector<128xf32> to vector<1x128xf32>
    %9 = tpu.iota {dimensions = array<i32: 0>} : vector<8x128xi32>
    %10 = vector.broadcast %8 : vector<1x128xf32> to vector<8x128xf32>
    %11 = arith.cmpf oeq, %6, %10 : vector<8x128xf32>
    %c8_i32 = arith.constant 8 : i32
    %12 = vector.broadcast %c8_i32 : i32 to vector<8x128xi32>
    %13 = arith.select %11, %9, %12 : vector<8x128xi1>, vector<8x128xi32>
    %cst_6 = arith.constant dense<2147483647> : vector<128xi32>
    %14 = vector.multi_reduction <minsi>, %13, %cst_6 [0] : vector<8x128xi32> to vector<128xi32>
    %15 = vector.shape_cast %14 : vector<128xi32> to vector<1x128xi32>
    %16 = vector.broadcast %15 : vector<1x128xi32> to vector<8x128xi32>
    %17 = arith.cmpi eq, %9, %16 : vector<8x128xi32>
    %18 = vector.broadcast %8 : vector<1x128xf32> to vector<8x128xf32>
    %19 = arith.subf %6, %18 : vector<8x128xf32>
    %20 = math.exp %19 : vector<8x128xf32>
    %cst_7 = arith.constant dense<0.000000e+00> : vector<128xf32>
    %21 = vector.multi_reduction <add>, %20, %cst_7 [0] : vector<8x128xf32> to vector<128xf32>
    %22 = vector.shape_cast %21 : vector<128xf32> to vector<1x128xf32>
    %23 = tpu.reciprocal %22 {approx = true} : vector<1x128xf32> -> vector<1x128xf32>
    %24 = arith.mulf %22, %23 : vector<1x128xf32>
    %cst_8 = arith.constant 2.000000e+00 : f32
    %25 = vector.broadcast %cst_8 : f32 to vector<1x128xf32>
    %26 = arith.subf %25, %24 : vector<1x128xf32>
    %27 = arith.mulf %23, %26 : vector<1x128xf32>
    %28 = vector.broadcast %27 : vector<1x128xf32> to vector<8x128xf32>
    %29 = arith.mulf %20, %28 : vector<8x128xf32>
    %cst_9 = arith.constant 0.000000e+00 : f32
    %30 = vector.broadcast %cst_9 : f32 to vector<8x128xf32>
    %31 = arith.select %17, %29, %30 : vector<8x128xi1>, vector<8x128xf32>
    %c0_10 = arith.constant 0 : index
    %c0_11 = arith.constant 0 : index
    %32 = vector.load %arg4[%c0_10, %c0_11] : memref<8x128xf32, #tpu.memory_space<vmem>>, vector<8x128xf32>
    tpu.vector_store %arg4[%c0_10, %c0_11], %31 {strides = array<i32>} : memref<8x128xf32, #tpu.memory_space<vmem>>, vector<8x128xf32>,
    return
  }
  func.func @transform_0(%arg0: i32) -> (i32, i32) {
    %c0_i32 = arith.constant 0 : i32
    %c0_i32_0 = arith.constant 0 : i32
    return %arg0, %c0_i32 : i32, i32
  }
  func.func @transform_1(%arg0: i32) -> (i32, i32) {
    %c0_i32 = arith.constant 0 : i32
    %c0_i32_0 = arith.constant 0 : i32
    %c0_i32_1 = arith.constant 0 : i32
    return %c0_i32, %c0_i32_0 : i32, i32
  }
  func.func @transform_2(%arg0: i32) -> (i32, i32) {
    %c0_i32 = arith.constant 0 : i32
    %c0_i32_0 = arith.constant 0 : i32
    %c0_i32_1 = arith.constant 0 : i32
    return %c0_i32, %c0_i32_0 : i32, i32
  }
  func.func @transform_3(%arg0: i32) -> (i32, i32) {
    %c0_i32 = arith.constant 0 : i32
    %c0_i32_0 = arith.constant 0 : i32
    return %c0_i32, %arg0 : i32, i32
  }
}

module attributes {stable_mosaic.version = 11 : i64} {
  func.func @_switch_gate_kernel(%arg0: i32, %arg1: memref<128x128xf32, #tpu.memory_space<vmem>>, %arg2: memref<8x128xf32, #tpu.memory_space<vmem>>, %arg3: memref<8x1xf32, #tpu.memory_space<vmem>>, %arg4: memref<8x128xf32, #tpu.memory_space<vmem>>) attributes {dimension_semantics = [#tpu.dimension_semantics<parallel>], iteration_bounds = array<i64: 2>, scalar_prefetch = 0 : i64, scratch_operands = 0 : i64, tpu.core_type = #tpu.core_type<tc>, window_params = [{transform_indices = @transform_0, window_bounds = array<i64: 128, 128>}, {pipeline_mode = #tpu.pipeline_mode<synchronous>, transform_indices = @transform_1, window_bounds = array<i64: 8, 128>}, {pipeline_mode = #tpu.pipeline_mode<synchronous>, transform_indices = @transform_2, window_bounds = array<i64: 8, 1>}, {transform_indices = @transform_3, window_bounds = array<i64: 8, 128>}]} {
    %c0 = arith.constant 0 : index
    %c0_0 = arith.constant 0 : index
    %0 = vector.load %arg1[%c0, %c0_0] : memref<128x128xf32, #tpu.memory_space<vmem>>, vector<128x128xf32>
    %c0_1 = arith.constant 0 : index
    %c0_2 = arith.constant 0 : index
    %1 = vector.load %arg2[%c0_1, %c0_2] : memref<8x128xf32, #tpu.memory_space<vmem>>, vector<8x128xf32>
    %cst = arith.constant dense<0.000000e+00> : vector<128x8xf32>
    %2 = tpu.matmul %0, %1, %cst {dimension_numbers = #tpu.dot_dimension_numbers<[1], [1], [0], [0], [0, 0, 1, 0], [], []>} : vector<128x128xf32>, vector<8x128xf32>, vector<128x8xf32> -> vector<128x8xf32>
    %3 = tpu.transpose %2, [1, 0] : vector<128x8xf32> -> vector<8x128xf32>
    %c0_3 = arith.constant 0 : index
    %c0_4 = arith.constant 0 : index
    %4 = vector.load %arg3[%c0_3, %c0_4] : memref<8x1xf32, #tpu.memory_space<vmem>>, vector<8x1xf32>
    %5 = vector.broadcast %4 : vector<8x1xf32> to vector<8x128xf32>
    %6 = arith.addf %3, %5 : vector<8x128xf32>
    %cst_5 = arith.constant dense<0xFF800000> : vector<128xf32>
    %7 = vector.multi_reduction <maximumf>, %6, %cst_5 [0] : vector<8x128xf32> to vector<128xf32>
    %8 = vector.shape_cast %7 : vector<128xf32> to vector<1x128xf32>
    %9 = tpu.iota {dimensions = array<i32: 0>} : vector<8x128xi32>
    %10 = vector.broadcast %8 : vector<1x128xf32> to vector<8x128xf32>
    %11 = arith.cmpf oeq, %6, %10 : vector<8x128xf32>
    %c8_i32 = arith.constant 8 : i32
    %12 = vector.broadcast %c8_i32 : i32 to vector<8x128xi32>
    %13 = arith.select %11, %9, %12 : vector<8x128xi1>, vector<8x128xi32>
    %cst_6 = arith.constant dense<2147483647> : vector<128xi32>
    %14 = vector.multi_reduction <minsi>, %13, %cst_6 [0] : vector<8x128xi32> to vector<128xi32>
    %15 = vector.shape_cast %14 : vector<128xi32> to vector<1x128xi32>
    %16 = vector.broadcast %15 : vector<1x128xi32> to vector<8x128xi32>
    %17 = arith.cmpi eq, %9, %16 : vector<8x128xi32>
    %18 = vector.broadcast %8 : vector<1x128xf32> to vector<8x128xf32>
    %19 = arith.subf %6, %18 : vector<8x128xf32>
    %20 = math.exp %19 : vector<8x128xf32>
    %cst_7 = arith.constant dense<0.000000e+00> : vector<128xf32>
    %21 = vector.multi_reduction <add>, %20, %cst_7 [0] : vector<8x128xf32> to vector<128xf32>
    %22 = vector.shape_cast %21 : vector<128xf32> to vector<1x128xf32>
    %23 = tpu.reciprocal %22 {approx = true} : vector<1x128xf32> -> vector<1x128xf32>
    %24 = arith.mulf %22, %23 : vector<1x128xf32>
    %cst_8 = arith.constant 2.000000e+00 : f32
    %25 = vector.broadcast %cst_8 : f32 to vector<1x128xf32>
    %26 = arith.subf %25, %24 : vector<1x128xf32>
    %27 = arith.mulf %23, %26 : vector<1x128xf32>
    %28 = vector.broadcast %27 : vector<1x128xf32> to vector<8x128xf32>
    %29 = arith.mulf %20, %28 : vector<8x128xf32>
    %cst_9 = arith.constant 0.000000e+00 : f32
    %30 = vector.broadcast %cst_9 : f32 to vector<8x128xf32>
    %31 = arith.select %17, %29, %30 : vector<8x128xi1>, vector<8x128xf32>
    %c0_10 = arith.constant 0 : index
    %c0_11 = arith.constant 0 : index
    %32 = vector.load %arg4[%c0_10, %c0_11] : memref<8x128xf32, #tpu.memory_space<vmem>>, vector<8x128xf32>
    tpu.vector_store %arg4[%c0_10, %c0_11], %31 {strides = array<i32>} : memref<8x128xf32, #tpu.memory_space<vmem>>, vector<8x128xf32>,
    return
  }
  func.func @transform_0(%arg0: i32) -> (i32, i32) {
    %c0_i32 = arith.constant 0 : i32
    %c0_i32_0 = arith.constant 0 : i32
    return %arg0, %c0_i32 : i32, i32
  }
  func.func @transform_1(%arg0: i32) -> (i32, i32) {
    %c0_i32 = arith.constant 0 : i32
    %c0_i32_0 = arith.constant 0 : i32
    %c0_i32_1 = arith.constant 0 : i32
    return %c0_i32, %c0_i32_0 : i32, i32
  }
  func.func @transform_2(%arg0: i32) -> (i32, i32) {
    %c0_i32 = arith.constant 0 : i32
    %c0_i32_0 = arith.constant 0 : i32
    %c0_i32_1 = arith.constant 0 : i32
    return %c0_i32, %c0_i32_0 : i32, i32
  }
  func.func @transform_3(%arg0: i32) -> (i32, i32) {
    %c0_i32 = arith.constant 0 : i32
    %c0_i32_0 = arith.constant 0 : i32
    return %c0_i32, %arg0 : i32, i32
  }
}

module attributes {stable_mosaic.version = 11 : i64} {
  func.func @_switch_gate_kernel(%arg0: i32, %arg1: memref<128x128xf32, #tpu.memory_space<vmem>>, %arg2: memref<8x128xf32, #tpu.memory_space<vmem>>, %arg3: memref<8x1xf32, #tpu.memory_space<vmem>>, %arg4: memref<8x128xf32, #tpu.memory_space<vmem>>) attributes {dimension_semantics = [#tpu.dimension_semantics<parallel>], iteration_bounds = array<i64: 2>, scalar_prefetch = 0 : i64, scratch_operands = 0 : i64, tpu.core_type = #tpu.core_type<tc>, window_params = [{transform_indices = @transform_0, window_bounds = array<i64: 128, 128>}, {pipeline_mode = #tpu.pipeline_mode<synchronous>, transform_indices = @transform_1, window_bounds = array<i64: 8, 128>}, {pipeline_mode = #tpu.pipeline_mode<synchronous>, transform_indices = @transform_2, window_bounds = array<i64: 8, 1>}, {transform_indices = @transform_3, window_bounds = array<i64: 8, 128>}]} {
    %c0 = arith.constant 0 : index
    %c0_0 = arith.constant 0 : index
    %0 = vector.load %arg2[%c0, %c0_0] : memref<8x128xf32, #tpu.memory_space<vmem>>, vector<8x128xf32>
    %c0_1 = arith.constant 0 : index
    %c0_2 = arith.constant 0 : index
    %1 = vector.load %arg1[%c0_1, %c0_2] : memref<128x128xf32, #tpu.memory_space<vmem>>, vector<128x128xf32>
    %cst = arith.constant dense<0.000000e+00> : vector<8x128xf32>
    %2 = tpu.matmul %0, %1, %cst {dimension_numbers = #tpu.dot_dimension_numbers<[1], [1], [0], [0], [0, 0, 1, 0], [], []>} : vector<8x128xf32>, vector<128x128xf32>, vector<8x128xf32> -> vector<8x128xf32>
    %c0_3 = arith.constant 0 : index
    %c0_4 = arith.constant 0 : index
    %3 = vector.load %arg3[%c0_3, %c0_4] : memref<8x1xf32, #tpu.memory_space<vmem>>, vector<8x1xf32>
    %4 = vector.broadcast %3 : vector<8x1xf32> to vector<8x128xf32>
    %5 = arith.addf %2, %4 : vector<8x128xf32>
    %cst_5 = arith.constant dense<0xFF800000> : vector<128xf32>
    %6 = vector.multi_reduction <maximumf>, %5, %cst_5 [0] : vector<8x128xf32> to vector<128xf32>
    %7 = vector.shape_cast %6 : vector<128xf32> to vector<1x128xf32>
    %8 = tpu.iota {dimensions = array<i32: 0>} : vector<8x128xi32>
    %9 = vector.broadcast %7 : vector<1x128xf32> to vector<8x128xf32>
    %10 = arith.cmpf oeq, %5, %9 : vector<8x128xf32>
    %c8_i32 = arith.constant 8 : i32
    %11 = vector.broadcast %c8_i32 : i32 to vector<8x128xi32>
    %12 = arith.select %10, %8, %11 : vector<8x128xi1>, vector<8x128xi32>
    %cst_6 = arith.constant dense<2147483647> : vector<128xi32>
    %13 = vector.multi_reduction <minsi>, %12, %cst_6 [0] : vector<8x128xi32> to vector<128xi32>
    %14 = vector.shape_cast %13 : vector<128xi32> to vector<1x128xi32>
    %15 = vector.broadcast %14 : vector<1x128xi32> to vector<8x128xi32>
    %16 = arith.cmpi eq, %8, %15 : vector<8x128xi32>
    %17 = vector.broadcast %7 : vector<1x128xf32> to vector<8x128xf32>
    %18 = arith.subf %5, %17 : vector<8x128xf32>
    %19 = math.exp %18 : vector<8x128xf32>
    %cst_7 = arith.constant dense<0.000000e+00> : vector<128xf32>
    %20 = vector.multi_reduction <add>, %19, %cst_7 [0] : vector<8x128xf32> to vector<128xf32>
    %21 = vector.shape_cast %20 : vector<128xf32> to vector<1x128xf32>
    %22 = tpu.reciprocal %21 {approx = true} : vector<1x128xf32> -> vector<1x128xf32>
    %23 = arith.mulf %21, %22 : vector<1x128xf32>
    %cst_8 = arith.constant 2.000000e+00 : f32
    %24 = vector.broadcast %cst_8 : f32 to vector<1x128xf32>
    %25 = arith.subf %24, %23 : vector<1x128xf32>
    %26 = arith.mulf %22, %25 : vector<1x128xf32>
    %27 = vector.broadcast %26 : vector<1x128xf32> to vector<8x128xf32>
    %28 = arith.mulf %19, %27 : vector<8x128xf32>
    %cst_9 = arith.constant 0.000000e+00 : f32
    %29 = vector.broadcast %cst_9 : f32 to vector<8x128xf32>
    %30 = arith.select %16, %28, %29 : vector<8x128xi1>, vector<8x128xf32>
    %c0_10 = arith.constant 0 : index
    %c0_11 = arith.constant 0 : index
    %31 = vector.load %arg4[%c0_10, %c0_11] : memref<8x128xf32, #tpu.memory_space<vmem>>, vector<8x128xf32>
    tpu.vector_store %arg4[%c0_10, %c0_11], %30 {strides = array<i32>} : memref<8x128xf32, #tpu.memory_space<vmem>>, vector<8x128xf32>,
    return
  }
  func.func @transform_0(%arg0: i32) -> (i32, i32) {
    %c0_i32 = arith.constant 0 : i32
    %c0_i32_0 = arith.constant 0 : i32
    return %arg0, %c0_i32 : i32, i32
  }
  func.func @transform_1(%arg0: i32) -> (i32, i32) {
    %c0_i32 = arith.constant 0 : i32
    %c0_i32_0 = arith.constant 0 : i32
    %c0_i32_1 = arith.constant 0 : i32
    return %c0_i32, %c0_i32_0 : i32, i32
  }
  func.func @transform_2(%arg0: i32) -> (i32, i32) {
    %c0_i32 = arith.constant 0 : i32
    %c0_i32_0 = arith.constant 0 : i32
    %c0_i32_1 = arith.constant 0 : i32
    return %c0_i32, %c0_i32_0 : i32, i32
  }
  func.func @transform_3(%arg0: i32) -> (i32, i32) {
    %c0_i32 = arith.constant 0 : i32
    %c0_i32_0 = arith.constant 0 : i32
    return %c0_i32, %arg0 : i32, i32
  }
}

</mosaic_0001>

<llo_original>
// kernel: tpu_custom_call.1
$region0: #{tpu_custom_call.1}
  #allocation0 [shape = 'u32[]', space=smem, size = 0x4, offset = 0x4, fixed_abs, tag = 'smem constant byte address 0x4 - core index']
  #allocation1 [shape = 'u32[72,128]{1,0:T(1,128)}', space=vmem, size = 0x9000, scoped, tag = 'internal scratch']
  %s0 = inlined_call_operand.hbm [shape: f32[256,128], index: 0, kind: input, shape index: {}]
  %s1 = inlined_call_operand.vmem [shape: f32[8,128], index: 1, kind: input, shape index: {}]
  %s2 = inlined_call_operand.vmem [shape: f32[8,1], index: 2, kind: input, shape index: {}]
  %s3 = inlined_call_operand.hbm [shape: f32[8,256], index: 3, kind: output, shape index: {}]
  %s4 = sld [smem:[#allocation0]]
  $region49: #{tpu_custom_call.1} parent=0
    _
  %s6 = ssub.s32 1, %s4
  %s7 = scalar_select 0, %s6, %s4
  $region1: #{tpu_custom_call.1} parent=0
    #allocation2 [shape = 'u8[131072]{0}', space=vmem, size = 0x20000, scoped, tag = 'input window, operand 0']
    #allocation3 [shape = 's32[2]{0}', space=sflag, size = 0x8, scoped, tag = 'scoped memory for tpu_custom_call.1']
    #allocation4 [shape = 's32[2]{0}', space=sflag, size = 0x8, scoped, tag = 'scoped memory for tpu_custom_call.1']
    #allocation5 [shape = 'u8[8192]{0}', space=vmem, size = 0x2000, scoped, tag = 'output window, operand 0']
    %8 = vsyncpa [#allocation3], 0
    %s9 = scalar_lea.sflag [#allocation3], 1
    %10 = vsyncpa %s9, 0
    %11 = vsyncpa [#allocation4], 0
    %s12 = scalar_lea.sflag [#allocation4], 1
    %13 = vsyncpa %s12, 0
    loop: start=0, step=1, limit=4
    $region2: #{tpu_custom_call.1} parent=1 // loop_pre_header
      _
    $region3: #{tpu_custom_call.1} parent=1 // loop_header
      %s15 = sphi 0, %s19
      %p16 = scmp.ge.s32.totalorder %s15, 4
      %s25 = sphi 0, %s27
      %s28 = sphi 0, %s25
      %s29 = sphi 0, %s28
      %s45 = sphi 0, %s29
      %s49 = sphi 0, %s49
      %s51 = sphi 0, %s49
      %s52 = sphi 0, %s51
      %s66 = sphi 0, %s52
      %s70 = sphi 0, %s70
      %s72 = sphi 0, %s70
      %s73 = sphi 0, %s72
      %s87 = sphi 0, %s73
      %s93 = sphi 0, %s95
      %s96 = sphi 0, %s93
      %s97 = sphi 0, %s96
      %s113 = sphi 0, %s97
    $region4: #{tpu_custom_call.1} parent=1 // loop_header_branch
      %18 = sbr.rel (%p16) target = $region8
    $region5: #{tpu_custom_call.1} parent=1 // loop_body
      %s20 = ssub.s32 %s15, 1
      %s21 = ssub.s32 %s15, 2
      %s22 = sadd.s32 %s15, 1
      %s23 = ssub.s32 %s15, %s22
      %p24 = scmp.eq.s32.totalorder %s23, 0
      %s26 = sadd.s32 %s25, 1
      %s27 = scalar_select %p24, %s25, %s26
      %p30 = pneg %p24
      %p31 = scmp.eq.s32.totalorder %s15, 1
      %p32 = por %p30, %p31
      %p33 = scmp.ne.s32.totalorder %s25, %s28
      %p34 = scmp.eq.s32.totalorder %s15, 0
      %p35 = por %p33, %p34
      %p36 = scmp.ne.s32.totalorder %s25, %s28
      %p37 = scmp.eq.s32.totalorder %s20, 1
      %p38 = por %p36, %p37
      %p39 = scmp.ne.s32.totalorder %s28, %s29
      %p40 = scmp.eq.s32.totalorder %s20, 0
      %p41 = por %p39, %p40
      %p42 = scmp.ne.s32.totalorder %s28, %s29
      %p43 = scmp.eq.s32.totalorder %s21, 1
      %p44 = por %p42, %p43
      %p46 = scmp.ne.s32.totalorder %s29, %s45
      %p47 = scmp.eq.s32.totalorder %s21, 0
      %p48 = por %p46, %p47
      %s50 = sadd.s32 %s49, 1
      %p53 = scmp.eq.s32.totalorder %s15, 1
      %p54 = scmp.ne.s32.totalorder %s49, %s51
      %p55 = scmp.eq.s32.totalorder %s15, 0
      %p56 = por %p54, %p55
      %p57 = scmp.ne.s32.totalorder %s49, %s51
      %p58 = scmp.eq.s32.totalorder %s20, 1
      %p59 = por %p57, %p58
      %p60 = scmp.ne.s32.totalorder %s51, %s52
      %p61 = scmp.eq.s32.totalorder %s20, 0
      %p62 = por %p60, %p61
      %p63 = scmp.ne.s32.totalorder %s51, %s52
      %p64 = scmp.eq.s32.totalorder %s21, 1
      %p65 = por %p63, %p64
      %p67 = scmp.ne.s32.totalorder %s52, %s66
      %p68 = scmp.eq.s32.totalorder %s21, 0
      %p69 = por %p67, %p68
      %s71 = sadd.s32 %s70, 1
      %p74 = scmp.eq.s32.totalorder %s15, 1
      %p75 = scmp.ne.s32.totalorder %s70, %s72
      %p76 = scmp.eq.s32.totalorder %s15, 0
      %p77 = por %p75, %p76
      %p78 = scmp.ne.s32.totalorder %s70, %s72
      %p79 = scmp.eq.s32.totalorder %s20, 1
      %p80 = por %p78, %p79
      %p81 = scmp.ne.s32.totalorder %s72, %s73
      %p82 = scmp.eq.s32.totalorder %s20, 0
      %p83 = por %p81, %p82
      %p84 = scmp.ne.s32.totalorder %s72, %s73
      %p85 = scmp.eq.s32.totalorder %s21, 1
      %p86 = por %p84, %p85
      %p88 = scmp.ne.s32.totalorder %s73, %s87
      %p89 = scmp.eq.s32.totalorder %s21, 0
      %p90 = por %p88, %p89
      %s91 = ssub.s32 %s15, %s22
      %p92 = scmp.eq.s32.totalorder %s91, 0
      %s94 = sadd.s32 %s93, 1
      %s95 = scalar_select %p92, %s93, %s94
      %p98 = pneg %p92
      %p99 = scmp.eq.s32.totalorder %s15, 1
      %p100 = por %p98, %p99
      %p101 = scmp.ne.s32.totalorder %s93, %s96
      %p102 = scmp.eq.s32.totalorder %s15, 0
      %p103 = por %p101, %p102
      %p104 = scmp.ne.s32.totalorder %s93, %s96
      %p105 = scmp.eq.s32.totalorder %s20, 1
      %p106 = por %p104, %p105
      %p107 = scmp.ne.s32.totalorder %s96, %s97
      %p108 = scmp.eq.s32.totalorder %s20, 0
      %p109 = por %p107, %p108
      %p110 = scmp.ne.s32.totalorder %s96, %s97
      %p111 = scmp.eq.s32.totalorder %s21, 1
      %p112 = por %p110, %p111
      %p114 = scmp.ne.s32.totalorder %s97, %s113
      %p115 = scmp.eq.s32.totalorder %s21, 0
      %p116 = por %p114, %p115
      %p117 = scmp.le.s32.totalorder 1, %s15
      %p118 = scmp.lt.s32.totalorder %s15, 3
      %p119 = pnand %p117, %p118
      %p120 = pneg %p119
      // Predicated region
      $region9: #{tpu_custom_call.1} parent=5 // pred_check
        _
      $region10: #{tpu_custom_call.1} parent=5 // pred_check_branch
        %122 = sbr.rel (%p119) target = $region12
      $region11: #{tpu_custom_call.1} parent=5 // pred_region
        %s123 = ssub.s32 %s15, 1
        // Predicated region
        $region13: #{tpu_custom_call.1} parent=11 // pred_check
          %p124 = pneg %p62
        $region14: #{tpu_custom_call.1} parent=11 // pred_check_branch
          %126 = sbr.rel (%p124) target = $region16
        $region15: #{tpu_custom_call.1} parent=11 // pred_region
          _
        $region16: #{tpu_custom_call.1} parent=11 // pred_fallthru
          _
        // Predicated region
        $region17: #{tpu_custom_call.1} parent=11 // pred_check
          %p127 = pneg %p83
        $region18: #{tpu_custom_call.1} parent=11 // pred_check_branch
          %129 = sbr.rel (%p127) target = $region20
        $region19: #{tpu_custom_call.1} parent=11 // pred_region
          _
        $region20: #{tpu_custom_call.1} parent=11 // pred_fallthru
          _
      $region12: #{tpu_custom_call.1} parent=5 // pred_fallthru
        _
      %p130 = scmp.lt.s32.totalorder %s15, 2
      // Predicated region
      $region21: #{tpu_custom_call.1} parent=5 // pred_check
        %p131 = pneg %p130
      $region22: #{tpu_custom_call.1} parent=5 // pred_check_branch
        %133 = sbr.rel (%p131) target = $region24
      $region23: #{tpu_custom_call.1} parent=5 // pred_region
        // Predicated region
        $region25: #{tpu_custom_call.1} parent=23 // pred_check
          %p134 = pneg %p35
        $region26: #{tpu_custom_call.1} parent=23 // pred_check_branch
          %136 = sbr.rel (%p134) target = $region28
        $region27: #{tpu_custom_call.1} parent=23 // pred_region
          %s137 = sand.u32 %s25, 1
          %s138 = scalar_lea.sflag [#allocation3], %s137
          %s139 = sand.u32 %s25, 1
          %s140 = smul.addr %s139, 128
          %s141 = scalar_lea.vmem [#allocation2], %s140
          %s142 = smul.u32 16, %s15
          %144 = vsyncadd %s138, 0
          %s145 = smul.addr %s142, 8
          %s146 = scalar_lea.hbm %s0, %s145
          %s147 = sshll.u32 %s146, 4
          %s148 = int_to_ptr.hbm [resolvable:$true] %s147
          %s149 = sshll.u32 %s141, 4
          %s150 = int_to_ptr.vmem [resolvable:$true] %s149
          %155 = dma.hbm_to_vmem [thread:$0]  %s148, 2048, %s150, %s138, 128, 128, 8
        $region28: #{tpu_custom_call.1} parent=23 // pred_fallthru
          _
      $region24: #{tpu_custom_call.1} parent=5 // pred_fallthru
        _
      %p156 = scmp.le.s32.totalorder 1, %s15
      %p157 = scmp.lt.s32.totalorder %s15, 3
      %p158 = pnand %p156, %p157
      %p159 = pneg %p158
      // Predicated region
      $region29: #{tpu_custom_call.1} parent=5 // pred_check
        _
      $region30: #{tpu_custom_call.1} parent=5 // pred_check_branch
        %161 = sbr.rel (%p158) target = $region32
      $region31: #{tpu_custom_call.1} parent=5 // pred_region
        %s162 = ssub.s32 %s15, 1
        %s163 = sand.u32 %s28, 1
        %s164 = scalar_lea.sflag [#allocation3], %s163
        %s165 = sand.u32 %s28, 1
        %s166 = smul.addr %s165, 128
        %s167 = scalar_lea.vmem [#allocation2], %s166
        // Predicated region
        $region33: #{tpu_custom_call.1} parent=31 // pred_check
          %p168 = pneg %p41
        $region34: #{tpu_custom_call.1} parent=31 // pred_check_branch
          %170 = sbr.rel (%p168) target = $region36
        $region35: #{tpu_custom_call.1} parent=31 // pred_region
          %172 = dma.done %s164, 2048
        $region36: #{tpu_custom_call.1} parent=31 // pred_fallthru
          _
        %s173 = sand.u32 %s28, 1
        %s174 = scalar_lea.sflag [#allocation3], %s173
        %s175 = sand.u32 %s28, 1
        %s176 = smul.addr %s175, 128
        %s177 = scalar_lea.vmem [#allocation2], %s176
        %p178 = pneg %p41
        %p179 = pneg %p38
        %p180 = pneg %p62
        %p181 = pneg %p59
        %p182 = pneg %p83
        %p183 = pneg %p80
        %p184 = pneg %p109
        %p185 = pneg %p106
        %s186 = sand.u32 %s96, 1
        %s187 = scalar_lea.sflag [#allocation4], %s186
        %s188 = sand.u32 %s96, 1
        %s189 = smul.addr %s188, 8
        %s190 = scalar_lea.vmem [#allocation5], %s189
        %s191 = smul.u32 16, %s20
        %v192 = vld [vmem:[%s167] sm:$0xff]
        %v193 = vld [vmem:[%s167 + $0x8] sm:$0xff]
        %v194 = vld [vmem:[%s167 + $0x10] sm:$0xff]
        %v195 = vld [vmem:[%s167 + $0x18] sm:$0xff]
        %v196 = vld [vmem:[%s167 + $0x20] sm:$0xff]
        %v197 = vld [vmem:[%s167 + $0x28] sm:$0xff]
        %v198 = vld [vmem:[%s167 + $0x30] sm:$0xff]
        %v199 = vld [vmem:[%s167 + $0x38] sm:$0xff]
        %v200 = vld [vmem:[%s167 + $0x40] sm:$0xff]
        %v201 = vld [vmem:[%s167 + $0x48] sm:$0xff]
        %v202 = vld [vmem:[%s167 + $0x50] sm:$0xff]
        %v203 = vld [vmem:[%s167 + $0x58] sm:$0xff]
        %v204 = vld [vmem:[%s167 + $0x60] sm:$0xff]
        %v205 = vld [vmem:[%s167 + $0x68] sm:$0xff]
        %v206 = vld [vmem:[%s167 + $0x70] sm:$0xff]
        %v207 = vld [vmem:[%s167 + $0x78] sm:$0xff]
        %v208 = vld [vmem:[%s1] sm:$0xff]
        %209 = vmatpush.xpose.msra.mxu0 0.0
        %210 = vmatpush.xpose.msra.mxu0 0.0
        %211 = vmatpush.xpose.msra.mxu0 0.0
        %212 = vmatpush.xpose.msra.mxu0 0.0
        %213 = vmatpush.xpose.msra.mxu0 0.0
        %214 = vmatpush.xpose.msra.mxu0 0.0
        %215 = vmatpush.xpose.msra.mxu0 0.0
        %216 = vmatpush.xpose.msra.mxu0 0.0
        %217 = vmatpush.xpose.msra.mxu0 0.0
        %218 = vmatpush.xpose.msra.mxu0 0.0
        %219 = vmatpush.xpose.msra.mxu0 0.0
        %220 = vmatpush.xpose.msra.mxu0 0.0
        %221 = vmatpush.xpose.msra.mxu0 0.0
        %222 = vmatpush.xpose.msra.mxu0 0.0
        %223 = vmatpush.xpose.msra.mxu0 0.0
        %224 = vmatpush.xpose.msra.mxu0 %v208
        %225 = vmatmul.f32.gmra.mxu0 %v192
        %v226 = vpop.f32.mrf.mxu0
        %v227 = vadd.f32 0.0, %v226
        %228 = vmatmul.f32.gmra.mxu0 %v193
        %v229 = vpop.f32.mrf.mxu0
        %v230 = vadd.f32 0.0, %v229
        %231 = vmatmul.f32.gmra.mxu0 %v194
        %v232 = vpop.f32.mrf.mxu0
        %v233 = vadd.f32 0.0, %v232
        %234 = vmatmul.f32.gmra.mxu0 %v195
        %v235 = vpop.f32.mrf.mxu0
        %v236 = vadd.f32 0.0, %v235
        %237 = vmatmul.f32.gmra.mxu0 %v196
        %v238 = vpop.f32.mrf.mxu0
        %v239 = vadd.f32 0.0, %v238
        %240 = vmatmul.f32.gmra.mxu0 %v197
        %v241 = vpop.f32.mrf.mxu0
        %v242 = vadd.f32 0.0, %v241
        %243 = vmatmul.f32.gmra.mxu0 %v198
        %v244 = vpop.f32.mrf.mxu0
        %v245 = vadd.f32 0.0, %v244
        %246 = vmatmul.f32.gmra.mxu0 %v199
        %v247 = vpop.f32.mrf.mxu0
        %v248 = vadd.f32 0.0, %v247
        %249 = vmatmul.f32.gmra.mxu0 %v200
        %v250 = vpop.f32.mrf.mxu0
        %v251 = vadd.f32 0.0, %v250
        %252 = vmatmul.f32.gmra.mxu0 %v201
        %v253 = vpop.f32.mrf.mxu0
        %v254 = vadd.f32 0.0, %v253
        %255 = vmatmul.f32.gmra.mxu0 %v202
        %v256 = vpop.f32.mrf.mxu0
        %v257 = vadd.f32 0.0, %v256
        %258 = vmatmul.f32.gmra.mxu0 %v203
        %v259 = vpop.f32.mrf.mxu0
        %v260 = vadd.f32 0.0, %v259
        %261 = vmatmul.f32.gmra.mxu0 %v204
        %v262 = vpop.f32.mrf.mxu0
        %v263 = vadd.f32 0.0, %v262
        %264 = vmatmul.f32.gmra.mxu0 %v205
        %v265 = vpop.f32.mrf.mxu0
        %v266 = vadd.f32 0.0, %v265
        %267 = vmatmul.f32.gmra.mxu0 %v206
        %v268 = vpop.f32.mrf.mxu0
        %v269 = vadd.f32 0.0, %v268
        %270 = vmatmul.f32.gmra.mxu0 %v207
        %v271 = vpop.f32.mrf.mxu0
        %v272 = vadd.f32 0.0, %v271
        %273 = vdwg.mxu0
        %274 = vxpose.xlu0.b32.start [1/16] %v227, 128
        %275 = vxpose.xlu0.b32.cont [2/16] %v230, 128
        %276 = vxpose.xlu0.b32.cont [3/16] %v233, 128
        %277 = vxpose.xlu0.b32.cont [4/16] %v236, 128
        %278 = vxpose.xlu0.b32.cont [5/16] %v239, 128
        %279 = vxpose.xlu0.b32.cont [6/16] %v242, 128
        %280 = vxpose.xlu0.b32.cont [7/16] %v245, 128
        %281 = vxpose.xlu0.b32.cont [8/16] %v248, 128
        %282 = vxpose.xlu0.b32.cont [9/16] %v251, 128
        %283 = vxpose.xlu0.b32.cont [10/16] %v254, 128
        %284 = vxpose.xlu0.b32.cont [11/16] %v257, 128
        %285 = vxpose.xlu0.b32.cont [12/16] %v260, 128
        %286 = vxpose.xlu0.b32.cont [13/16] %v263, 128
        %287 = vxpose.xlu0.b32.cont [14/16] %v266, 128
        %288 = vxpose.xlu0.b32.cont [15/16] %v269, 128
        %289 = vxpose.xlu0.b32.end [16/16] %v272, 128
        %v290 = vpop.trf.xlu0
        %v291 = vpop.trf.xlu0
        %v292 = vpop.trf.xlu0
        %v293 = vpop.trf.xlu0
        %v294 = vpop.trf.xlu0
        %v295 = vpop.trf.xlu0
        %v296 = vpop.trf.xlu0
        %v297 = vpop.trf.xlu0
        %v298 = vpop.trf.xlu0
        %v299 = vpop.trf.xlu0
        %v300 = vpop.trf.xlu0
        %v301 = vpop.trf.xlu0
        %v302 = vpop.trf.xlu0
        %v303 = vpop.trf.xlu0
        %v304 = vpop.trf.xlu0
        %v305 = vpop.trf.xlu0
        %v306 = vld [vmem:[%s2] sm:$0xff]
        %308 = vset.pattern.permute.xlu0 0
        %309 = vperm.xlu0 %308, %v306
        %v310 = vpop.permute.xlu0 %309
        %v312 = vadd.f32 %v290, %v310
        %v313 = vrot.slane %v312, 4
        %v314 = vmax.f32 %v312, %v313
        %v315 = vrot.slane %v314, 2
        %v316 = vmax.f32 %v314, %v315
        %v317 = vrot.slane %v316, 1
        %v318 = vmax.f32 %v316, %v317
        %v319 = vlaneseq
        %v320 = vshrl.u32 %v319, 7
        %vm321 = vcmp.eq.f32.partialorder %v312, %v318
        %v322 = vsel %vm321, %v320, 8
        %v323 = vrot.slane %v322, 4
        %vm324 = vcmp.lt.s32.totalorder %v322, %v323
        %v325 = vsel %vm324, %v322, %v323
        %v326 = vrot.slane %v325, 2
        %vm327 = vcmp.lt.s32.totalorder %v325, %v326
        %v328 = vsel %vm327, %v325, %v326
        %v329 = vrot.slane %v328, 1
        %vm330 = vcmp.lt.s32.totalorder %v328, %v329
        %v331 = vsel %vm330, %v328, %v329
        %vm332 = vcmp.eq.s32.totalorder %v320, %v331
        %v333 = vsub.f32 %v312, %v318
        %v334 = vmul.f32 %v333, 1.442695
        %v335 = vpow.pop %v334
        %v336 = vrot.slane %v335, 4
        %v337 = vadd.f32 %v335, %v336
        %v338 = vrot.slane %v337, 2
        %v339 = vadd.f32 %v337, %v338
        %v340 = vrot.slane %v339, 1
        %v341 = vadd.f32 %v339, %v340
        %v342 = vrcp.pop %v341
        %v343 = vmul.f32 %v341, %v342
        %v344 = vsub.f32 2.0, %v343
        %v345 = vmul.f32 %v342, %v344
        %v346 = vmul.f32 %v335, %v345
        %v347 = vsel %vm332, %v346, 0.0
        %348 = vst [vmem:[%s190] sm:$0xff] %v347
        %s349 = sand.u32 %s96, 1
        %s350 = scalar_lea.sflag [#allocation4], %s349
        %s351 = sand.u32 %s96, 1
        %s352 = smul.addr %s351, 8
        %s353 = scalar_lea.vmem [#allocation5], %s352
        // Predicated region
        $region37: #{tpu_custom_call.1} parent=31 // pred_check
          %p354 = pneg %p106
        $region38: #{tpu_custom_call.1} parent=31 // pred_check_branch
          %356 = sbr.rel (%p354) target = $region40
        $region39: #{tpu_custom_call.1} parent=31 // pred_region
          %358 = vsyncadd %s350, 0
          %s359 = smul.addr %s20, 8
          %s360 = scalar_lea.hbm %s3, %s359
          %s362 = sshll.u32 %s353, 4
          %s363 = int_to_ptr.vmem [resolvable:$true] %s362
          %s364 = sshll.u32 %s360, 4
          %s365 = int_to_ptr.hbm [resolvable:$true] %s364
          %367 = dma.vmem_to_hbm [thread:$0]  %s363, 128, %s365, %s350
        $region40: #{tpu_custom_call.1} parent=31 // pred_fallthru
          _
      $region32: #{tpu_custom_call.1} parent=5 // pred_fallthru
        _
      %p368 = scmp.le.s32.totalorder 2, %s15
      // Predicated region
      $region41: #{tpu_custom_call.1} parent=5 // pred_check
        %p369 = pneg %p368
      $region42: #{tpu_custom_call.1} parent=5 // pred_check_branch
        %371 = sbr.rel (%p369) target = $region44
      $region43: #{tpu_custom_call.1} parent=5 // pred_region
        %s372 = ssub.s32 %s15, 2
        // Predicated region
        $region45: #{tpu_custom_call.1} parent=43 // pred_check
          %p373 = pneg %p112
        $region46: #{tpu_custom_call.1} parent=43 // pred_check_branch
          %375 = sbr.rel (%p373) target = $region48
        $region47: #{tpu_custom_call.1} parent=43 // pred_region
          %s376 = sand.u32 %s97, 1
          %s377 = scalar_lea.sflag [#allocation4], %s376
          %s378 = sand.u32 %s97, 1
          %s379 = smul.addr %s378, 8
          %s380 = scalar_lea.vmem [#allocation5], %s379
          %382 = dma.done %s377, 128
        $region48: #{tpu_custom_call.1} parent=43 // pred_fallthru
          _
      $region44: #{tpu_custom_call.1} parent=5 // pred_fallthru
        _
    $region6: #{tpu_custom_call.1} parent=1 // loop_footer
      %s19 = sadd.s32 1, %s15
    $region7: #{tpu_custom_call.1} parent=1 // loop_footer_branch
      %14 = sbr.rel target = $region3
    $region8: #{tpu_custom_call.1} parent=1 // loop_exit
      _
    %383 = vsyncpa [#allocation3], 1
    %s384 = scalar_lea.sflag [#allocation3], 1
    %385 = vsyncpa %s384, 1
    %386 = vsyncpa [#allocation4], 1
    %s387 = scalar_lea.sflag [#allocation4], 1
    %388 = vsyncpa %s387, 1

// kernel: tpu_custom_call.1
$region0: #{tpu_custom_call.1}
  #allocation0 [shape = 'u32[]', space=smem, size = 0x4, offset = 0x4, fixed_abs, tag = 'smem constant byte address 0x4 - core index']
  #allocation1 [shape = 'u32[72,128]{1,0:T(1,128)}', space=vmem, size = 0x9000, scoped, tag = 'internal scratch']
  %s0 = inlined_call_operand.hbm [shape: f32[256,128], index: 0, kind: input, shape index: {}]
  %s1 = inlined_call_operand.vmem [shape: f32[8,128], index: 1, kind: input, shape index: {}]
  %s2 = inlined_call_operand.vmem [shape: f32[8,1], index: 2, kind: input, shape index: {}]
  %s3 = inlined_call_operand.hbm [shape: f32[8,256], index: 3, kind: output, shape index: {}]
  %s4 = sld [smem:[#allocation0]]
  $region49: #{tpu_custom_call.1} parent=0
    _
  %s6 = ssub.s32 1, %s4
  %s7 = scalar_select 0, %s6, %s4
  $region1: #{tpu_custom_call.1} parent=0
    #allocation2 [shape = 'u8[131072]{0}', space=vmem, size = 0x20000, scoped, tag = 'input window, operand 0']
    #allocation3 [shape = 's32[2]{0}', space=sflag, size = 0x8, scoped, tag = 'scoped memory for tpu_custom_call.1']
    #allocation4 [shape = 's32[2]{0}', space=sflag, size = 0x8, scoped, tag = 'scoped memory for tpu_custom_call.1']
    #allocation5 [shape = 'u8[8192]{0}', space=vmem, size = 0x2000, scoped, tag = 'output window, operand 0']
    %8 = vsyncpa [#allocation3], 0
    %s9 = scalar_lea.sflag [#allocation3], 1
    %10 = vsyncpa %s9, 0
    %11 = vsyncpa [#allocation4], 0
    %s12 = scalar_lea.sflag [#allocation4], 1
    %13 = vsyncpa %s12, 0
    loop: start=0, step=1, limit=4
    $region2: #{tpu_custom_call.1} parent=1 // loop_pre_header
      _
    $region3: #{tpu_custom_call.1} parent=1 // loop_header
      %s15 = sphi 0, %s19
      %p16 = scmp.ge.s32.totalorder %s15, 4
      %s25 = sphi 0, %s27
      %s28 = sphi 0, %s25
      %s29 = sphi 0, %s28
      %s45 = sphi 0, %s29
      %s49 = sphi 0, %s49
      %s51 = sphi 0, %s49
      %s52 = sphi 0, %s51
      %s66 = sphi 0, %s52
      %s70 = sphi 0, %s70
      %s72 = sphi 0, %s70
      %s73 = sphi 0, %s72
      %s87 = sphi 0, %s73
      %s93 = sphi 0, %s95
      %s96 = sphi 0, %s93
      %s97 = sphi 0, %s96
      %s113 = sphi 0, %s97
    $region4: #{tpu_custom_call.1} parent=1 // loop_header_branch
      %18 = sbr.rel (%p16) target = $region8
    $region5: #{tpu_custom_call.1} parent=1 // loop_body
      %s20 = ssub.s32 %s15, 1
      %s21 = ssub.s32 %s15, 2
      %s22 = sadd.s32 %s15, 1
      %s23 = ssub.s32 %s15, %s22
      %p24 = scmp.eq.s32.totalorder %s23, 0
      %s26 = sadd.s32 %s25, 1
      %s27 = scalar_select %p24, %s25, %s26
      %p30 = pneg %p24
      %p31 = scmp.eq.s32.totalorder %s15, 1
      %p32 = por %p30, %p31
      %p33 = scmp.ne.s32.totalorder %s25, %s28
      %p34 = scmp.eq.s32.totalorder %s15, 0
      %p35 = por %p33, %p34
      %p36 = scmp.ne.s32.totalorder %s25, %s28
      %p37 = scmp.eq.s32.totalorder %s20, 1
      %p38 = por %p36, %p37
      %p39 = scmp.ne.s32.totalorder %s28, %s29
      %p40 = scmp.eq.s32.totalorder %s20, 0
      %p41 = por %p39, %p40
      %p42 = scmp.ne.s32.totalorder %s28, %s29
      %p43 = scmp.eq.s32.totalorder %s21, 1
      %p44 = por %p42, %p43
      %p46 = scmp.ne.s32.totalorder %s29, %s45
      %p47 = scmp.eq.s32.totalorder %s21, 0
      %p48 = por %p46, %p47
      %s50 = sadd.s32 %s49, 1
      %p53 = scmp.eq.s32.totalorder %s15, 1
      %p54 = scmp.ne.s32.totalorder %s49, %s51
      %p55 = scmp.eq.s32.totalorder %s15, 0
      %p56 = por %p54, %p55
      %p57 = scmp.ne.s32.totalorder %s49, %s51
      %p58 = scmp.eq.s32.totalorder %s20, 1
      %p59 = por %p57, %p58
      %p60 = scmp.ne.s32.totalorder %s51, %s52
      %p61 = scmp.eq.s32.totalorder %s20, 0
      %p62 = por %p60, %p61
      %p63 = scmp.ne.s32.totalorder %s51, %s52
      %p64 = scmp.eq.s32.totalorder %s21, 1
      %p65 = por %p63, %p64
      %p67 = scmp.ne.s32.totalorder %s52, %s66
      %p68 = scmp.eq.s32.totalorder %s21, 0
      %p69 = por %p67, %p68
      %s71 = sadd.s32 %s70, 1
      %p74 = scmp.eq.s32.totalorder %s15, 1
      %p75 = scmp.ne.s32.totalorder %s70, %s72
      %p76 = scmp.eq.s32.totalorder %s15, 0
      %p77 = por %p75, %p76
      %p78 = scmp.ne.s32.totalorder %s70, %s72
      %p79 = scmp.eq.s32.totalorder %s20, 1
      %p80 = por %p78, %p79
      %p81 = scmp.ne.s32.totalorder %s72, %s73
      %p82 = scmp.eq.s32.totalorder %s20, 0
      %p83 = por %p81, %p82
      %p84 = scmp.ne.s32.totalorder %s72, %s73
      %p85 = scmp.eq.s32.totalorder %s21, 1
      %p86 = por %p84, %p85
      %p88 = scmp.ne.s32.totalorder %s73, %s87
      %p89 = scmp.eq.s32.totalorder %s21, 0
      %p90 = por %p88, %p89
      %s91 = ssub.s32 %s15, %s22
      %p92 = scmp.eq.s32.totalorder %s91, 0
      %s94 = sadd.s32 %s93, 1
      %s95 = scalar_select %p92, %s93, %s94
      %p98 = pneg %p92
      %p99 = scmp.eq.s32.totalorder %s15, 1
      %p100 = por %p98, %p99
      %p101 = scmp.ne.s32.totalorder %s93, %s96
      %p102 = scmp.eq.s32.totalorder %s15, 0
      %p103 = por %p101, %p102
      %p104 = scmp.ne.s32.totalorder %s93, %s96
      %p105 = scmp.eq.s32.totalorder %s20, 1
      %p106 = por %p104, %p105
      %p107 = scmp.ne.s32.totalorder %s96, %s97
      %p108 = scmp.eq.s32.totalorder %s20, 0
      %p109 = por %p107, %p108
      %p110 = scmp.ne.s32.totalorder %s96, %s97
      %p111 = scmp.eq.s32.totalorder %s21, 1
      %p112 = por %p110, %p111
      %p114 = scmp.ne.s32.totalorder %s97, %s113
      %p115 = scmp.eq.s32.totalorder %s21, 0
      %p116 = por %p114, %p115
      %p117 = scmp.le.s32.totalorder 1, %s15
      %p118 = scmp.lt.s32.totalorder %s15, 3
      %p119 = pnand %p117, %p118
      %p120 = pneg %p119
      // Predicated region
      $region9: #{tpu_custom_call.1} parent=5 // pred_check
        _
      $region10: #{tpu_custom_call.1} parent=5 // pred_check_branch
        %122 = sbr.rel (%p119) target = $region12
      $region11: #{tpu_custom_call.1} parent=5 // pred_region
        %s123 = ssub.s32 %s15, 1
        // Predicated region
        $region13: #{tpu_custom_call.1} parent=11 // pred_check
          %p124 = pneg %p62
        $region14: #{tpu_custom_call.1} parent=11 // pred_check_branch
          %126 = sbr.rel (%p124) target = $region16
        $region15: #{tpu_custom_call.1} parent=11 // pred_region
          _
        $region16: #{tpu_custom_call.1} parent=11 // pred_fallthru
          _
        // Predicated region
        $region17: #{tpu_custom_call.1} parent=11 // pred_check
          %p127 = pneg %p83
        $region18: #{tpu_custom_call.1} parent=11 // pred_check_branch
          %129 = sbr.rel (%p127) target = $region20
        $region19: #{tpu_custom_call.1} parent=11 // pred_region
          _
        $region20: #{tpu_custom_call.1} parent=11 // pred_fallthru
          _
      $region12: #{tpu_custom_call.1} parent=5 // pred_fallthru
        _
      %p130 = scmp.lt.s32.totalorder %s15, 2
      // Predicated region
      $region21: #{tpu_custom_call.1} parent=5 // pred_check
        %p131 = pneg %p130
      $region22: #{tpu_custom_call.1} parent=5 // pred_check_branch
        %133 = sbr.rel (%p131) target = $region24
      $region23: #{tpu_custom_call.1} parent=5 // pred_region
        // Predicated region
        $region25: #{tpu_custom_call.1} parent=23 // pred_check
          %p134 = pneg %p35
        $region26: #{tpu_custom_call.1} parent=23 // pred_check_branch
          %136 = sbr.rel (%p134) target = $region28
        $region27: #{tpu_custom_call.1} parent=23 // pred_region
          %s137 = sand.u32 %s25, 1
          %s138 = scalar_lea.sflag [#allocation3], %s137
          %s139 = sand.u32 %s25, 1
          %s140 = smul.addr %s139, 128
          %s141 = scalar_lea.vmem [#allocation2], %s140
          %s142 = smul.u32 16, %s15
          %144 = vsyncadd %s138, 0
          %s145 = smul.addr %s142, 8
          %s146 = scalar_lea.hbm %s0, %s145
          %s147 = sshll.u32 %s146, 4
          %s148 = int_to_ptr.hbm [resolvable:$true] %s147
          %s149 = sshll.u32 %s141, 4
          %s150 = int_to_ptr.vmem [resolvable:$true] %s149
          %155 = dma.hbm_to_vmem [thread:$0]  %s148, 2048, %s150, %s138, 128, 128, 8
        $region28: #{tpu_custom_call.1} parent=23 // pred_fallthru
          _
      $region24: #{tpu_custom_call.1} parent=5 // pred_fallthru
        _
      %p156 = scmp.le.s32.totalorder 1, %s15
      %p157 = scmp.lt.s32.totalorder %s15, 3
      %p158 = pnand %p156, %p157
      %p159 = pneg %p158
      // Predicated region
      $region29: #{tpu_custom_call.1} parent=5 // pred_check
        _
      $region30: #{tpu_custom_call.1} parent=5 // pred_check_branch
        %161 = sbr.rel (%p158) target = $region32
      $region31: #{tpu_custom_call.1} parent=5 // pred_region
        %s162 = ssub.s32 %s15, 1
        %s163 = sand.u32 %s28, 1
        %s164 = scalar_lea.sflag [#allocation3], %s163
        %s165 = sand.u32 %s28, 1
        %s166 = smul.addr %s165, 128
        %s167 = scalar_lea.vmem [#allocation2], %s166
        // Predicated region
        $region33: #{tpu_custom_call.1} parent=31 // pred_check
          %p168 = pneg %p41
        $region34: #{tpu_custom_call.1} parent=31 // pred_check_branch
          %170 = sbr.rel (%p168) target = $region36
        $region35: #{tpu_custom_call.1} parent=31 // pred_region
          %172 = dma.done %s164, 2048
        $region36: #{tpu_custom_call.1} parent=31 // pred_fallthru
          _
        %s173 = sand.u32 %s28, 1
        %s174 = scalar_lea.sflag [#allocation3], %s173
        %s175 = sand.u32 %s28, 1
        %s176 = smul.addr %s175, 128
        %s177 = scalar_lea.vmem [#allocation2], %s176
        %p178 = pneg %p41
        %p179 = pneg %p38
        %p180 = pneg %p62
        %p181 = pneg %p59
        %p182 = pneg %p83
        %p183 = pneg %p80
        %p184 = pneg %p109
        %p185 = pneg %p106
        %s186 = sand.u32 %s96, 1
        %s187 = scalar_lea.sflag [#allocation4], %s186
        %s188 = sand.u32 %s96, 1
        %s189 = smul.addr %s188, 8
        %s190 = scalar_lea.vmem [#allocation5], %s189
        %s191 = smul.u32 16, %s20
        %v192 = vld [vmem:[%s167] sm:$0xff]
        %v193 = vld [vmem:[%s167 + $0x8] sm:$0xff]
        %v194 = vld [vmem:[%s167 + $0x10] sm:$0xff]
        %v195 = vld [vmem:[%s167 + $0x18] sm:$0xff]
        %v196 = vld [vmem:[%s167 + $0x20] sm:$0xff]
        %v197 = vld [vmem:[%s167 + $0x28] sm:$0xff]
        %v198 = vld [vmem:[%s167 + $0x30] sm:$0xff]
        %v199 = vld [vmem:[%s167 + $0x38] sm:$0xff]
        %v200 = vld [vmem:[%s167 + $0x40] sm:$0xff]
        %v201 = vld [vmem:[%s167 + $0x48] sm:$0xff]
        %v202 = vld [vmem:[%s167 + $0x50] sm:$0xff]
        %v203 = vld [vmem:[%s167 + $0x58] sm:$0xff]
        %v204 = vld [vmem:[%s167 + $0x60] sm:$0xff]
        %v205 = vld [vmem:[%s167 + $0x68] sm:$0xff]
        %v206 = vld [vmem:[%s167 + $0x70] sm:$0xff]
        %v207 = vld [vmem:[%s167 + $0x78] sm:$0xff]
        %v208 = vld [vmem:[%s1] sm:$0xff]
        %209 = vmatpush.xpose.msra.mxu0 0.0
        %210 = vmatpush.xpose.msra.mxu0 0.0
        %211 = vmatpush.xpose.msra.mxu0 0.0
        %212 = vmatpush.xpose.msra.mxu0 0.0
        %213 = vmatpush.xpose.msra.mxu0 0.0
        %214 = vmatpush.xpose.msra.mxu0 0.0
        %215 = vmatpush.xpose.msra.mxu0 0.0
        %216 = vmatpush.xpose.msra.mxu0 0.0
        %217 = vmatpush.xpose.msra.mxu0 0.0
        %218 = vmatpush.xpose.msra.mxu0 0.0
        %219 = vmatpush.xpose.msra.mxu0 0.0
        %220 = vmatpush.xpose.msra.mxu0 0.0
        %221 = vmatpush.xpose.msra.mxu0 0.0
        %222 = vmatpush.xpose.msra.mxu0 0.0
        %223 = vmatpush.xpose.msra.mxu0 0.0
        %224 = vmatpush.xpose.msra.mxu0 %v208
        %225 = vmatmul.f32.gmra.mxu0 %v192
        %v226 = vpop.f32.mrf.mxu0
        %v227 = vadd.f32 0.0, %v226
        %228 = vmatmul.f32.gmra.mxu0 %v193
        %v229 = vpop.f32.mrf.mxu0
        %v230 = vadd.f32 0.0, %v229
        %231 = vmatmul.f32.gmra.mxu0 %v194
        %v232 = vpop.f32.mrf.mxu0
        %v233 = vadd.f32 0.0, %v232
        %234 = vmatmul.f32.gmra.mxu0 %v195
        %v235 = vpop.f32.mrf.mxu0
        %v236 = vadd.f32 0.0, %v235
        %237 = vmatmul.f32.gmra.mxu0 %v196
        %v238 = vpop.f32.mrf.mxu0
        %v239 = vadd.f32 0.0, %v238
        %240 = vmatmul.f32.gmra.mxu0 %v197
        %v241 = vpop.f32.mrf.mxu0
        %v242 = vadd.f32 0.0, %v241
        %243 = vmatmul.f32.gmra.mxu0 %v198
        %v244 = vpop.f32.mrf.mxu0
        %v245 = vadd.f32 0.0, %v244
        %246 = vmatmul.f32.gmra.mxu0 %v199
        %v247 = vpop.f32.mrf.mxu0
        %v248 = vadd.f32 0.0, %v247
        %249 = vmatmul.f32.gmra.mxu0 %v200
        %v250 = vpop.f32.mrf.mxu0
        %v251 = vadd.f32 0.0, %v250
        %252 = vmatmul.f32.gmra.mxu0 %v201
        %v253 = vpop.f32.mrf.mxu0
        %v254 = vadd.f32 0.0, %v253
        %255 = vmatmul.f32.gmra.mxu0 %v202
        %v256 = vpop.f32.mrf.mxu0
        %v257 = vadd.f32 0.0, %v256
        %258 = vmatmul.f32.gmra.mxu0 %v203
        %v259 = vpop.f32.mrf.mxu0
        %v260 = vadd.f32 0.0, %v259
        %261 = vmatmul.f32.gmra.mxu0 %v204
        %v262 = vpop.f32.mrf.mxu0
        %v263 = vadd.f32 0.0, %v262
        %264 = vmatmul.f32.gmra.mxu0 %v205
        %v265 = vpop.f32.mrf.mxu0
        %v266 = vadd.f32 0.0, %v265
        %267 = vmatmul.f32.gmra.mxu0 %v206
        %v268 = vpop.f32.mrf.mxu0
        %v269 = vadd.f32 0.0, %v268
        %270 = vmatmul.f32.gmra.mxu0 %v207
        %v271 = vpop.f32.mrf.mxu0
        %v272 = vadd.f32 0.0, %v271
        %273 = vdwg.mxu0
        %274 = vxpose.xlu0.b32.start [1/16] %v227, 128
        %275 = vxpose.xlu0.b32.cont [2/16] %v230, 128
        %276 = vxpose.xlu0.b32.cont [3/16] %v233, 128
        %277 = vxpose.xlu0.b32.cont [4/16] %v236, 128
        %278 = vxpose.xlu0.b32.cont [5/16] %v239, 128
        %279 = vxpose.xlu0.b32.cont [6/16] %v242, 128
        %280 = vxpose.xlu0.b32.cont [7/16] %v245, 128
        %281 = vxpose.xlu0.b32.cont [8/16] %v248, 128
        %282 = vxpose.xlu0.b32.cont [9/16] %v251, 128
        %283 = vxpose.xlu0.b32.cont [10/16] %v254, 128
        %284 = vxpose.xlu0.b32.cont [11/16] %v257, 128
        %285 = vxpose.xlu0.b32.cont [12/16] %v260, 128
        %286 = vxpose.xlu0.b32.cont [13/16] %v263, 128
        %287 = vxpose.xlu0.b32.cont [14/16] %v266, 128
        %288 = vxpose.xlu0.b32.cont [15/16] %v269, 128
        %289 = vxpose.xlu0.b32.end [16/16] %v272, 128
        %v290 = vpop.trf.xlu0
        %v291 = vpop.trf.xlu0
        %v292 = vpop.trf.xlu0
        %v293 = vpop.trf.xlu0
        %v294 = vpop.trf.xlu0
        %v295 = vpop.trf.xlu0
        %v296 = vpop.trf.xlu0
        %v297 = vpop.trf.xlu0
        %v298 = vpop.trf.xlu0
        %v299 = vpop.trf.xlu0
        %v300 = vpop.trf.xlu0
        %v301 = vpop.trf.xlu0
        %v302 = vpop.trf.xlu0
        %v303 = vpop.trf.xlu0
        %v304 = vpop.trf.xlu0
        %v305 = vpop.trf.xlu0
        %v306 = vld [vmem:[%s2] sm:$0xff]
        %308 = vset.pattern.permute.xlu0 0
        %309 = vperm.xlu0 %308, %v306
        %v310 = vpop.permute.xlu0 %309
        %v312 = vadd.f32 %v290, %v310
        %v313 = vrot.slane %v312, 4
        %v314 = vmax.f32 %v312, %v313
        %v315 = vrot.slane %v314, 2
        %v316 = vmax.f32 %v314, %v315
        %v317 = vrot.slane %v316, 1
        %v318 = vmax.f32 %v316, %v317
        %v319 = vlaneseq
        %v320 = vshrl.u32 %v319, 7
        %vm321 = vcmp.eq.f32.partialorder %v312, %v318
        %v322 = vsel %vm321, %v320, 8
        %v323 = vrot.slane %v322, 4
        %vm324 = vcmp.lt.s32.totalorder %v322, %v323
        %v325 = vsel %vm324, %v322, %v323
        %v326 = vrot.slane %v325, 2
        %vm327 = vcmp.lt.s32.totalorder %v325, %v326
        %v328 = vsel %vm327, %v325, %v326
        %v329 = vrot.slane %v328, 1
        %vm330 = vcmp.lt.s32.totalorder %v328, %v329
        %v331 = vsel %vm330, %v328, %v329
        %vm332 = vcmp.eq.s32.totalorder %v320, %v331
        %v333 = vsub.f32 %v312, %v318
        %v334 = vmul.f32 %v333, 1.442695
        %v335 = vpow.pop %v334
        %v336 = vrot.slane %v335, 4
        %v337 = vadd.f32 %v335, %v336
        %v338 = vrot.slane %v337, 2
        %v339 = vadd.f32 %v337, %v338
        %v340 = vrot.slane %v339, 1
        %v341 = vadd.f32 %v339, %v340
        %v342 = vrcp.pop %v341
        %v343 = vmul.f32 %v341, %v342
        %v344 = vsub.f32 2.0, %v343
        %v345 = vmul.f32 %v342, %v344
        %v346 = vmul.f32 %v335, %v345
        %v347 = vsel %vm332, %v346, 0.0
        %348 = vst [vmem:[%s190] sm:$0xff] %v347
        %s349 = sand.u32 %s96, 1
        %s350 = scalar_lea.sflag [#allocation4], %s349
        %s351 = sand.u32 %s96, 1
        %s352 = smul.addr %s351, 8
        %s353 = scalar_lea.vmem [#allocation5], %s352
        // Predicated region
        $region37: #{tpu_custom_call.1} parent=31 // pred_check
          %p354 = pneg %p106
        $region38: #{tpu_custom_call.1} parent=31 // pred_check_branch
          %356 = sbr.rel (%p354) target = $region40
        $region39: #{tpu_custom_call.1} parent=31 // pred_region
          %358 = vsyncadd %s350, 0
          %s359 = smul.addr %s20, 8
          %s360 = scalar_lea.hbm %s3, %s359
          %s362 = sshll.u32 %s353, 4
          %s363 = int_to_ptr.vmem [resolvable:$true] %s362
          %s364 = sshll.u32 %s360, 4
          %s365 = int_to_ptr.hbm [resolvable:$true] %s364
          %367 = dma.vmem_to_hbm [thread:$0]  %s363, 128, %s365, %s350
        $region40: #{tpu_custom_call.1} parent=31 // pred_fallthru
          _
      $region32: #{tpu_custom_call.1} parent=5 // pred_fallthru
        _
      %p368 = scmp.le.s32.totalorder 2, %s15
      // Predicated region
      $region41: #{tpu_custom_call.1} parent=5 // pred_check
        %p369 = pneg %p368
      $region42: #{tpu_custom_call.1} parent=5 // pred_check_branch
        %371 = sbr.rel (%p369) target = $region44
      $region43: #{tpu_custom_call.1} parent=5 // pred_region
        %s372 = ssub.s32 %s15, 2
        // Predicated region
        $region45: #{tpu_custom_call.1} parent=43 // pred_check
          %p373 = pneg %p112
        $region46: #{tpu_custom_call.1} parent=43 // pred_check_branch
          %375 = sbr.rel (%p373) target = $region48
        $region47: #{tpu_custom_call.1} parent=43 // pred_region
          %s376 = sand.u32 %s97, 1
          %s377 = scalar_lea.sflag [#allocation4], %s376
          %s378 = sand.u32 %s97, 1
          %s379 = smul.addr %s378, 8
          %s380 = scalar_lea.vmem [#allocation5], %s379
          %382 = dma.done %s377, 128
        $region48: #{tpu_custom_call.1} parent=43 // pred_fallthru
          _
      $region44: #{tpu_custom_call.1} parent=5 // pred_fallthru
        _
    $region6: #{tpu_custom_call.1} parent=1 // loop_footer
      %s19 = sadd.s32 1, %s15
    $region7: #{tpu_custom_call.1} parent=1 // loop_footer_branch
      %14 = sbr.rel target = $region3
    $region8: #{tpu_custom_call.1} parent=1 // loop_exit
      _
    %383 = vsyncpa [#allocation3], 1
    %s384 = scalar_lea.sflag [#allocation3], 1
    %385 = vsyncpa %s384, 1
    %386 = vsyncpa [#allocation4], 1
    %s387 = scalar_lea.sflag [#allocation4], 1
    %388 = vsyncpa %s387, 1

// kernel: tpu_custom_call.1
$region0: #{tpu_custom_call.1}
  #allocation0 [shape = 'u32[]', space=smem, size = 0x4, offset = 0x4, fixed_abs, tag = 'smem constant byte address 0x4 - core index']
  #allocation1 [shape = 'u32[72,128]{1,0:T(1,128)}', space=vmem, size = 0x9000, scoped, tag = 'internal scratch']
  %s0 = inlined_call_operand.hbm [shape: f32[256,128], index: 0, kind: input, shape index: {}]
  %s1 = inlined_call_operand.vmem [shape: f32[8,128], index: 1, kind: input, shape index: {}]
  %s2 = inlined_call_operand.vmem [shape: f32[8,1], index: 2, kind: input, shape index: {}]
  %s3 = inlined_call_operand.hbm [shape: f32[8,256], index: 3, kind: output, shape index: {}]
  %s4 = sld [smem:[#allocation0]]
  $region49: #{tpu_custom_call.1} parent=0
    _
  %s6 = ssub.s32 1, %s4
  %s7 = scalar_select 0, %s6, %s4
  $region1: #{tpu_custom_call.1} parent=0
    #allocation2 [shape = 'u8[131072]{0}', space=vmem, size = 0x20000, scoped, tag = 'input window, operand 0']
    #allocation3 [shape = 's32[2]{0}', space=sflag, size = 0x8, scoped, tag = 'scoped memory for tpu_custom_call.1']
    #allocation4 [shape = 's32[2]{0}', space=sflag, size = 0x8, scoped, tag = 'scoped memory for tpu_custom_call.1']
    #allocation5 [shape = 'u8[8192]{0}', space=vmem, size = 0x2000, scoped, tag = 'output window, operand 0']
    %8 = vsyncpa [#allocation3], 0
    %s9 = scalar_lea.sflag [#allocation3], 1
    %10 = vsyncpa %s9, 0
    %11 = vsyncpa [#allocation4], 0
    %s12 = scalar_lea.sflag [#allocation4], 1
    %13 = vsyncpa %s12, 0
    loop: start=0, step=1, limit=4
    $region2: #{tpu_custom_call.1} parent=1 // loop_pre_header
      _
    $region3: #{tpu_custom_call.1} parent=1 // loop_header
      %s15 = sphi 0, %s19
      %p16 = scmp.ge.s32.totalorder %s15, 4
      %s25 = sphi 0, %s27
      %s28 = sphi 0, %s25
      %s29 = sphi 0, %s28
      %s45 = sphi 0, %s29
      %s49 = sphi 0, %s49
      %s51 = sphi 0, %s49
      %s52 = sphi 0, %s51
      %s66 = sphi 0, %s52
      %s70 = sphi 0, %s70
      %s72 = sphi 0, %s70
      %s73 = sphi 0, %s72
      %s87 = sphi 0, %s73
      %s93 = sphi 0, %s95
      %s96 = sphi 0, %s93
      %s97 = sphi 0, %s96
      %s113 = sphi 0, %s97
    $region4: #{tpu_custom_call.1} parent=1 // loop_header_branch
      %18 = sbr.rel (%p16) target = $region8
    $region5: #{tpu_custom_call.1} parent=1 // loop_body
      %s20 = ssub.s32 %s15, 1
      %s21 = ssub.s32 %s15, 2
      %s22 = sadd.s32 %s15, 1
      %s23 = ssub.s32 %s15, %s22
      %p24 = scmp.eq.s32.totalorder %s23, 0
      %s26 = sadd.s32 %s25, 1
      %s27 = scalar_select %p24, %s25, %s26
      %p30 = pneg %p24
      %p31 = scmp.eq.s32.totalorder %s15, 1
      %p32 = por %p30, %p31
      %p33 = scmp.ne.s32.totalorder %s25, %s28
      %p34 = scmp.eq.s32.totalorder %s15, 0
      %p35 = por %p33, %p34
      %p36 = scmp.ne.s32.totalorder %s25, %s28
      %p37 = scmp.eq.s32.totalorder %s20, 1
      %p38 = por %p36, %p37
      %p39 = scmp.ne.s32.totalorder %s28, %s29
      %p40 = scmp.eq.s32.totalorder %s20, 0
      %p41 = por %p39, %p40
      %p42 = scmp.ne.s32.totalorder %s28, %s29
      %p43 = scmp.eq.s32.totalorder %s21, 1
      %p44 = por %p42, %p43
      %p46 = scmp.ne.s32.totalorder %s29, %s45
      %p47 = scmp.eq.s32.totalorder %s21, 0
      %p48 = por %p46, %p47
      %s50 = sadd.s32 %s49, 1
      %p53 = scmp.eq.s32.totalorder %s15, 1
      %p54 = scmp.ne.s32.totalorder %s49, %s51
      %p55 = scmp.eq.s32.totalorder %s15, 0
      %p56 = por %p54, %p55
      %p57 = scmp.ne.s32.totalorder %s49, %s51
      %p58 = scmp.eq.s32.totalorder %s20, 1
      %p59 = por %p57, %p58
      %p60 = scmp.ne.s32.totalorder %s51, %s52
      %p61 = scmp.eq.s32.totalorder %s20, 0
      %p62 = por %p60, %p61
      %p63 = scmp.ne.s32.totalorder %s51, %s52
      %p64 = scmp.eq.s32.totalorder %s21, 1
      %p65 = por %p63, %p64
      %p67 = scmp.ne.s32.totalorder %s52, %s66
      %p68 = scmp.eq.s32.totalorder %s21, 0
      %p69 = por %p67, %p68
      %s71 = sadd.s32 %s70, 1
      %p74 = scmp.eq.s32.totalorder %s15, 1
      %p75 = scmp.ne.s32.totalorder %s70, %s72
      %p76 = scmp.eq.s32.totalorder %s15, 0
      %p77 = por %p75, %p76
      %p78 = scmp.ne.s32.totalorder %s70, %s72
      %p79 = scmp.eq.s32.totalorder %s20, 1
      %p80 = por %p78, %p79
      %p81 = scmp.ne.s32.totalorder %s72, %s73
      %p82 = scmp.eq.s32.totalorder %s20, 0
      %p83 = por %p81, %p82
      %p84 = scmp.ne.s32.totalorder %s72, %s73
      %p85 = scmp.eq.s32.totalorder %s21, 1
      %p86 = por %p84, %p85
      %p88 = scmp.ne.s32.totalorder %s73, %s87
      %p89 = scmp.eq.s32.totalorder %s21, 0
      %p90 = por %p88, %p89
      %s91 = ssub.s32 %s15, %s22
      %p92 = scmp.eq.s32.totalorder %s91, 0
      %s94 = sadd.s32 %s93, 1
      %s95 = scalar_select %p92, %s93, %s94
      %p98 = pneg %p92
      %p99 = scmp.eq.s32.totalorder %s15, 1
      %p100 = por %p98, %p99
      %p101 = scmp.ne.s32.totalorder %s93, %s96
      %p102 = scmp.eq.s32.totalorder %s15, 0
      %p103 = por %p101, %p102
      %p104 = scmp.ne.s32.totalorder %s93, %s96
      %p105 = scmp.eq.s32.totalorder %s20, 1
      %p106 = por %p104, %p105
      %p107 = scmp.ne.s32.totalorder %s96, %s97
      %p108 = scmp.eq.s32.totalorder %s20, 0
      %p109 = por %p107, %p108
      %p110 = scmp.ne.s32.totalorder %s96, %s97
      %p111 = scmp.eq.s32.totalorder %s21, 1
      %p112 = por %p110, %p111
      %p114 = scmp.ne.s32.totalorder %s97, %s113
      %p115 = scmp.eq.s32.totalorder %s21, 0
      %p116 = por %p114, %p115
      %p117 = scmp.le.s32.totalorder 1, %s15
      %p118 = scmp.lt.s32.totalorder %s15, 3
      %p119 = pnand %p117, %p118
      %p120 = pneg %p119
      // Predicated region
      $region9: #{tpu_custom_call.1} parent=5 // pred_check
        _
      $region10: #{tpu_custom_call.1} parent=5 // pred_check_branch
        %122 = sbr.rel (%p119) target = $region12
      $region11: #{tpu_custom_call.1} parent=5 // pred_region
        %s123 = ssub.s32 %s15, 1
        // Predicated region
        $region13: #{tpu_custom_call.1} parent=11 // pred_check
          %p124 = pneg %p62
        $region14: #{tpu_custom_call.1} parent=11 // pred_check_branch
          %126 = sbr.rel (%p124) target = $region16
        $region15: #{tpu_custom_call.1} parent=11 // pred_region
          _
        $region16: #{tpu_custom_call.1} parent=11 // pred_fallthru
          _
        // Predicated region
        $region17: #{tpu_custom_call.1} parent=11 // pred_check
          %p127 = pneg %p83
        $region18: #{tpu_custom_call.1} parent=11 // pred_check_branch
          %129 = sbr.rel (%p127) target = $region20
        $region19: #{tpu_custom_call.1} parent=11 // pred_region
          _
        $region20: #{tpu_custom_call.1} parent=11 // pred_fallthru
          _
      $region12: #{tpu_custom_call.1} parent=5 // pred_fallthru
        _
      %p130 = scmp.lt.s32.totalorder %s15, 2
      // Predicated region
      $region21: #{tpu_custom_call.1} parent=5 // pred_check
        %p131 = pneg %p130
      $region22: #{tpu_custom_call.1} parent=5 // pred_check_branch
        %133 = sbr.rel (%p131) target = $region24
      $region23: #{tpu_custom_call.1} parent=5 // pred_region
        // Predicated region
        $region25: #{tpu_custom_call.1} parent=23 // pred_check
          %p134 = pneg %p35
        $region26: #{tpu_custom_call.1} parent=23 // pred_check_branch
          %136 = sbr.rel (%p134) target = $region28
        $region27: #{tpu_custom_call.1} parent=23 // pred_region
          %s137 = sand.u32 %s25, 1
          %s138 = scalar_lea.sflag [#allocation3], %s137
          %s139 = sand.u32 %s25, 1
          %s140 = smul.addr %s139, 128
          %s141 = scalar_lea.vmem [#allocation2], %s140
          %s142 = smul.u32 16, %s15
          %144 = vsyncadd %s138, 0
          %s145 = smul.addr %s142, 8
          %s146 = scalar_lea.hbm %s0, %s145
          %s147 = sshll.u32 %s146, 4
          %s148 = int_to_ptr.hbm [resolvable:$true] %s147
          %s149 = sshll.u32 %s141, 4
          %s150 = int_to_ptr.vmem [resolvable:$true] %s149
          %155 = dma.hbm_to_vmem [thread:$0]  %s148, 2048, %s150, %s138, 128, 128, 8
        $region28: #{tpu_custom_call.1} parent=23 // pred_fallthru
          _
      $region24: #{tpu_custom_call.1} parent=5 // pred_fallthru
        _
      %p156 = scmp.le.s32.totalorder 1, %s15
      %p157 = scmp.lt.s32.totalorder %s15, 3
      %p158 = pnand %p156, %p157
      %p159 = pneg %p158
      // Predicated region
      $region29: #{tpu_custom_call.1} parent=5 // pred_check
        _
      $region30: #{tpu_custom_call.1} parent=5 // pred_check_branch
        %161 = sbr.rel (%p158) target = $region32
      $region31: #{tpu_custom_call.1} parent=5 // pred_region
        %s162 = ssub.s32 %s15, 1
        %s163 = sand.u32 %s28, 1
        %s164 = scalar_lea.sflag [#allocation3], %s163
        %s165 = sand.u32 %s28, 1
        %s166 = smul.addr %s165, 128
        %s167 = scalar_lea.vmem [#allocation2], %s166
        // Predicated region
        $region33: #{tpu_custom_call.1} parent=31 // pred_check
          %p168 = pneg %p41
        $region34: #{tpu_custom_call.1} parent=31 // pred_check_branch
          %170 = sbr.rel (%p168) target = $region36
        $region35: #{tpu_custom_call.1} parent=31 // pred_region
          %172 = dma.done %s164, 2048
        $region36: #{tpu_custom_call.1} parent=31 // pred_fallthru
          _
        %s173 = sand.u32 %s28, 1
        %s174 = scalar_lea.sflag [#allocation3], %s173
        %s175 = sand.u32 %s28, 1
        %s176 = smul.addr %s175, 128
        %s177 = scalar_lea.vmem [#allocation2], %s176
        %p178 = pneg %p41
        %p179 = pneg %p38
        %p180 = pneg %p62
        %p181 = pneg %p59
        %p182 = pneg %p83
        %p183 = pneg %p80
        %p184 = pneg %p109
        %p185 = pneg %p106
        %s186 = sand.u32 %s96, 1
        %s187 = scalar_lea.sflag [#allocation4], %s186
        %s188 = sand.u32 %s96, 1
        %s189 = smul.addr %s188, 8
        %s190 = scalar_lea.vmem [#allocation5], %s189
        %s191 = smul.u32 16, %s20
        %v192 = vld [vmem:[%s1] sm:$0xff]
        %v193 = vld [vmem:[%s167] sm:$0xff]
        %v194 = vld [vmem:[%s167 + $0x8] sm:$0xff]
        %v195 = vld [vmem:[%s167 + $0x10] sm:$0xff]
        %v196 = vld [vmem:[%s167 + $0x18] sm:$0xff]
        %v197 = vld [vmem:[%s167 + $0x20] sm:$0xff]
        %v198 = vld [vmem:[%s167 + $0x28] sm:$0xff]
        %v199 = vld [vmem:[%s167 + $0x30] sm:$0xff]
        %v200 = vld [vmem:[%s167 + $0x38] sm:$0xff]
        %v201 = vld [vmem:[%s167 + $0x40] sm:$0xff]
        %v202 = vld [vmem:[%s167 + $0x48] sm:$0xff]
        %v203 = vld [vmem:[%s167 + $0x50] sm:$0xff]
        %v204 = vld [vmem:[%s167 + $0x58] sm:$0xff]
        %v205 = vld [vmem:[%s167 + $0x60] sm:$0xff]
        %v206 = vld [vmem:[%s167 + $0x68] sm:$0xff]
        %v207 = vld [vmem:[%s167 + $0x70] sm:$0xff]
        %v208 = vld [vmem:[%s167 + $0x78] sm:$0xff]
        %v209 = vld [vmem:[%s2] sm:$0xff]
        %211 = vset.pattern.permute.xlu0 0
        %212 = vperm.xlu0 %211, %v209
        %v213 = vpop.permute.xlu0 %212
        %215 = vmatpush.xpose.msra.mxu0 %v208
        %216 = vmatpush.xpose.msra.mxu0 %v207
        %217 = vmatpush.xpose.msra.mxu0 %v206
        %218 = vmatpush.xpose.msra.mxu0 %v205
        %219 = vmatpush.xpose.msra.mxu0 %v204
        %220 = vmatpush.xpose.msra.mxu0 %v203
        %221 = vmatpush.xpose.msra.mxu0 %v202
        %222 = vmatpush.xpose.msra.mxu0 %v201
        %223 = vmatpush.xpose.msra.mxu0 %v200
        %224 = vmatpush.xpose.msra.mxu0 %v199
        %225 = vmatpush.xpose.msra.mxu0 %v198
        %226 = vmatpush.xpose.msra.mxu0 %v197
        %227 = vmatpush.xpose.msra.mxu0 %v196
        %228 = vmatpush.xpose.msra.mxu0 %v195
        %229 = vmatpush.xpose.msra.mxu0 %v194
        %230 = vmatpush.xpose.msra.mxu0 %v193
        %231 = vmatmul.f32.gmra.mxu0 %v192
        %v232 = vpop.f32.mrf.mxu0
        %v233 = vadd.f32 %v213, %v232
        %234 = vdwg.mxu0
        %v235 = vrot.slane %v233, 4
        %v236 = vmax.f32 %v233, %v235
        %v237 = vrot.slane %v236, 2
        %v238 = vmax.f32 %v236, %v237
        %v239 = vrot.slane %v238, 1
        %v240 = vmax.f32 %v238, %v239
        %v241 = vlaneseq
        %v242 = vshrl.u32 %v241, 7
        %vm243 = vcmp.eq.f32.partialorder %v233, %v240
        %v244 = vsel %vm243, %v242, 8
        %v245 = vrot.slane %v244, 4
        %vm246 = vcmp.lt.s32.totalorder %v244, %v245
        %v247 = vsel %vm246, %v244, %v245
        %v248 = vrot.slane %v247, 2
        %vm249 = vcmp.lt.s32.totalorder %v247, %v248
        %v250 = vsel %vm249, %v247, %v248
        %v251 = vrot.slane %v250, 1
        %vm252 = vcmp.lt.s32.totalorder %v250, %v251
        %v253 = vsel %vm252, %v250, %v251
        %vm254 = vcmp.eq.s32.totalorder %v242, %v253
        %v255 = vsub.f32 %v233, %v240
        %v256 = vmul.f32 %v255, 1.442695
        %v257 = vpow.pop %v256
        %v258 = vrot.slane %v257, 4
        %v259 = vadd.f32 %v257, %v258
        %v260 = vrot.slane %v259, 2
        %v261 = vadd.f32 %v259, %v260
        %v262 = vrot.slane %v261, 1
        %v263 = vadd.f32 %v261, %v262
        %v264 = vrcp.pop %v263
        %v265 = vmul.f32 %v263, %v264
        %v266 = vsub.f32 2.0, %v265
        %v267 = vmul.f32 %v264, %v266
        %v268 = vmul.f32 %v257, %v267
        %v269 = vsel %vm254, %v268, 0.0
        %270 = vst [vmem:[%s190] sm:$0xff] %v269
        %s271 = sand.u32 %s96, 1
        %s272 = scalar_lea.sflag [#allocation4], %s271
        %s273 = sand.u32 %s96, 1
        %s274 = smul.addr %s273, 8
        %s275 = scalar_lea.vmem [#allocation5], %s274
        // Predicated region
        $region37: #{tpu_custom_call.1} parent=31 // pred_check
          %p276 = pneg %p106
        $region38: #{tpu_custom_call.1} parent=31 // pred_check_branch
          %278 = sbr.rel (%p276) target = $region40
        $region39: #{tpu_custom_call.1} parent=31 // pred_region
          %280 = vsyncadd %s272, 0
          %s281 = smul.addr %s20, 8
          %s282 = scalar_lea.hbm %s3, %s281
          %s284 = sshll.u32 %s275, 4
          %s285 = int_to_ptr.vmem [resolvable:$true] %s284
          %s286 = sshll.u32 %s282, 4
          %s287 = int_to_ptr.hbm [resolvable:$true] %s286
          %289 = dma.vmem_to_hbm [thread:$0]  %s285, 128, %s287, %s272
        $region40: #{tpu_custom_call.1} parent=31 // pred_fallthru
          _
      $region32: #{tpu_custom_call.1} parent=5 // pred_fallthru
        _
      %p290 = scmp.le.s32.totalorder 2, %s15
      // Predicated region
      $region41: #{tpu_custom_call.1} parent=5 // pred_check
        %p291 = pneg %p290
      $region42: #{tpu_custom_call.1} parent=5 // pred_check_branch
        %293 = sbr.rel (%p291) target = $region44
      $region43: #{tpu_custom_call.1} parent=5 // pred_region
        %s294 = ssub.s32 %s15, 2
        // Predicated region
        $region45: #{tpu_custom_call.1} parent=43 // pred_check
          %p295 = pneg %p112
        $region46: #{tpu_custom_call.1} parent=43 // pred_check_branch
          %297 = sbr.rel (%p295) target = $region48
        $region47: #{tpu_custom_call.1} parent=43 // pred_region
          %s298 = sand.u32 %s97, 1
          %s299 = scalar_lea.sflag [#allocation4], %s298
          %s300 = sand.u32 %s97, 1
          %s301 = smul.addr %s300, 8
          %s302 = scalar_lea.vmem [#allocation5], %s301
          %304 = dma.done %s299, 128
        $region48: #{tpu_custom_call.1} parent=43 // pred_fallthru
          _
      $region44: #{tpu_custom_call.1} parent=5 // pred_fallthru
        _
    $region6: #{tpu_custom_call.1} parent=1 // loop_footer
      %s19 = sadd.s32 1, %s15
    $region7: #{tpu_custom_call.1} parent=1 // loop_footer_branch
      %14 = sbr.rel target = $region3
    $region8: #{tpu_custom_call.1} parent=1 // loop_exit
      _
    %305 = vsyncpa [#allocation3], 1
    %s306 = scalar_lea.sflag [#allocation3], 1
    %307 = vsyncpa %s306, 1
    %308 = vsyncpa [#allocation4], 1
    %s309 = scalar_lea.sflag [#allocation4], 1
    %310 = vsyncpa %s309, 1

</llo_original>
